<compile_context>
chip_gen: v7x
topology: tpu7x:2x2x1
jax: 0.10.0
libtpu: 0.0.40
codegen_flags: <defaults>
</compile_context>

<pallas_src>
import jax
import jax.numpy as jnp
from jax.experimental import pallas as pl
from jax.experimental.pallas import tpu as pltpu

# ----- small, shape-consistent configuration -----
NUM_CLASSES = 2
LATENT = 128      # stands in for efficientnet-b0's 1280-dim latent features
HIDDEN = 128      # stands in for hidden_dim=2048
KSIZE = 3
STRIDE = 2
PAD = 1
LANE = 128        # lane-dense padding for the tiny classifier output


# ---------------------------------------------------------------------------
# Kernel A: stand-in CNN (conv as patch-matmul + SiLU) + AdaptiveAvgPool2d(1)
#           + LSTM input projection X @ W_ih + (b_ih + b_hh), all fused.
# ---------------------------------------------------------------------------
def conv_pool_proj_kernel(p_ref, wc_ref, bc_ref, wih_ref, bl_ref, out_ref):
    nb, g4 = out_ref.shape                    # samples in this block, 4*H
    rows, _ = p_ref.shape                     # nb * P patch rows
    p_per = rows // nb                        # spatial positions per sample

    # one big MXU matmul for all samples in the block (bf16 x bf16 -> f32 acc)
    acts = jnp.dot(p_ref[...], wc_ref[...],
                   preferred_element_type=jnp.float32) + bc_ref[...]
    acts = acts * jax.nn.sigmoid(acts)                         # SiLU (f32 VPU/EUP)

    # global average pool per sample (sum + multiply by precomputed 1/P)
    pooled = jnp.sum(acts.reshape(nb, p_per, acts.shape[-1]), axis=1)
    pooled = pooled * (1.0 / p_per)                            # (nb, LATENT) f32

    # hoisted LSTM input projection: X @ W_ih + (b_ih + b_hh)
    xg = jnp.dot(pooled.astype(wih_ref.dtype), wih_ref[...],
                 preferred_element_type=jnp.float32)
    out_ref[...] = xg + bl_ref[...]                            # (nb, 4H) f32


def _pick_nb(n):
    # largest per-step sample block that keeps the (NB, 4H) output block
    # sublane-aligned; fall back to the whole batch (full-dim block).
    for nb in (64, 32, 16, 8):
        if n % nb == 0:
            return nb
    return n


def cnn_pool_proj(patches_flat, n, p, wc, bc, wih, bl):
    rows, kp = patches_flat.shape             # rows = n * p
    latent = wc.shape[1]
    g4 = wih.shape[1]
    nb = _pick_nb(n)
    return pl.pallas_call(
        conv_pool_proj_kernel,
        out_shape=jax.ShapeDtypeStruct((n, g4), jnp.float32),
        grid_spec=pltpu.PrefetchScalarGridSpec(
            num_scalar_prefetch=0,
            grid=(n // nb,),
            in_specs=[
                pl.BlockSpec((nb * p, kp), lambda i: (i, 0)),
                pl.BlockSpec((kp, latent), lambda i: (0, 0)),
                pl.BlockSpec((1, latent), lambda i: (0, 0)),
                pl.BlockSpec((latent, g4), lambda i: (0, 0)),
                pl.BlockSpec((1, g4), lambda i: (0, 0)),
            ],
            out_specs=pl.BlockSpec((nb, g4), lambda i: (i, 0)),
        ),
        compiler_params=pltpu.CompilerParams(
            dimension_semantics=("parallel",)),   # megacore-shardable sample axis
    )(patches_flat, wc, bc, wih, bl)


# ---------------------------------------------------------------------------
# Kernel B: single-invocation LSTM recurrence (PyTorch gate order i,f,g,o) over
#           precomputed gate inputs, fused with mean-over-time and the head
#           (LayerNorm -> LeakyReLU -> Dropout[identity] -> Linear, padded).
# ---------------------------------------------------------------------------
def lstm_head_kernel(xg_ref, whh_ref, g_ref, be_ref, w_ref, b_ref, out_ref):
    S, B, _ = xg_ref.shape
    H = whh_ref.shape[0]
    whh = whh_ref[...]                                          # resident bf16

    def step(t, carry):
        h, c, acc = carry
        gates = xg_ref[t] + jnp.dot(h.astype(whh.dtype), whh,
                                    preferred_element_type=jnp.float32)
        i_g = jax.nn.sigmoid(gates[:, 0 * H:1 * H])
        f_g = jax.nn.sigmoid(gates[:, 1 * H:2 * H])
        g_g = jnp.tanh(gates[:, 2 * H:3 * H])
        o_g = jax.nn.sigmoid(gates[:, 3 * H:4 * H])
        c_new = f_g * c + i_g * g_g
        h_new = o_g * jnp.tanh(c_new)
        return h_new, c_new, acc + h_new

    zeros = jnp.zeros((B, H), jnp.float32)
    _, _, acc = jax.lax.fori_loop(0, S, step, (zeros, zeros, zeros), unroll=True)

    mean_h = acc * (1.0 / S)                                    # mean over time
    mu = jnp.mean(mean_h, axis=-1, keepdims=True)
    var = jnp.mean((mean_h - mu) ** 2, axis=-1, keepdims=True)
    xn = (mean_h - mu) * jax.lax.rsqrt(var + 1e-5)              # LayerNorm (eps 1e-5)
    y = xn * g_ref[...] + be_ref[...]
    y = jnp.where(y >= 0, y, 0.01 * y)                          # LeakyReLU (slope 0.01)
    out_ref[...] = (jnp.dot(y, w_ref[...], preferred_element_type=jnp.float32)
                    + b_ref[...])                               # lane-dense (B, 128)


def lstm_head(xg_seq, whh, gamma, beta, w_pad, b_pad):
    S, B, g4 = xg_seq.shape
    H = whh.shape[0]
    cpad = w_pad.shape[1]
    return pl.pallas_call(
        lstm_head_kernel,
        out_shape=jax.ShapeDtypeStruct((B, cpad), jnp.float32),
        grid_spec=pltpu.PrefetchScalarGridSpec(
            num_scalar_prefetch=0,
            grid=(1,),
            in_specs=[
                pl.BlockSpec((S, B, g4), lambda i: (0, 0, 0)),
                pl.BlockSpec((H, g4), lambda i: (0, 0)),
                pl.BlockSpec((1, H), lambda i: (0, 0)),
                pl.BlockSpec((1, H), lambda i: (0, 0)),
                pl.BlockSpec((H, cpad), lambda i: (0, 0)),
                pl.BlockSpec((1, cpad), lambda i: (0, 0)),
            ],
            out_specs=pl.BlockSpec((B, cpad), lambda i: (0, 0)),
        ),
        compiler_params=pltpu.CompilerParams(
            dimension_semantics=("arbitrary",)),
    )(xg_seq, whh, gamma, beta, w_pad, b_pad)


# ---------------------------------------------------------------------------
# Plain-JAX glue
# ---------------------------------------------------------------------------
def extract_patches(x):
    """x: (N, C, H, W) NCHW -> im2col patches (N, OH*OW, K_pad), K = c*9+kh*3+kw.

    Built directly in (N, P, K) order (K axis last); only the input image is
    NHWC-transposed (9x smaller than the patch tensor), and K is zero-padded
    up to a multiple of 8.
    """
    N, C, H, W = x.shape
    xn = jnp.transpose(x, (0, 2, 3, 1))                                  # NHWC
    xp = jnp.pad(xn, ((0, 0), (PAD, PAD), (PAD, PAD), (0, 0)))
    OH = (H + 2 * PAD - KSIZE) // STRIDE + 1
    OW = (W + 2 * PAD - KSIZE) // STRIDE + 1
    taps = []
    for kh in range(KSIZE):
        for kw in range(KSIZE):
            taps.append(xp[:, kh:kh + STRIDE * OH:STRIDE,
                            kw:kw + STRIDE * OW:STRIDE, :])              # (N,OH,OW,C)
    p = jnp.stack(taps, axis=-1)                                         # (N,OH,OW,C,9)
    p = p.reshape(N, OH * OW, C * KSIZE * KSIZE)                         # K = c*9+kh*3+kw
    k = p.shape[-1]
    kpad = -(-k // 8) * 8
    if kpad != k:
        p = jnp.pad(p, ((0, 0), (0, 0), (0, kpad - k)))
    return p


def face_classifier_forward(x, params):
    if x.ndim == 4:                                              # mirror unsqueeze(1)
        x = x[:, None]
    B, S, C, H, W = x.shape
    xf = x.reshape(B * S, C, H, W)
    patches = extract_patches(xf)                                # (N, P, Kpad)
    N, P, Kp = patches.shape
    patches_flat = patches.reshape(N * P, Kp).astype(jnp.bfloat16)

    # conv + SiLU + avgpool + hoisted LSTM input projection (per frame)
    xgates = cnn_pool_proj(patches_flat, N, P,
                           params["conv_w_mat"], params["conv_b"],
                           params["w_ih_t"], params["lstm_b"])   # (B*S, 4H) f32

    # sequence layout for the recurrence: (S, B, 4H) -- tiny tensor
    xg_seq = xgates.reshape(B, S, 4 * HIDDEN).transpose(1, 0, 2)

    logits_pad = lstm_head(xg_seq, params["w_hh_t"],
                           params["ln_gamma"], params["ln_beta"],
                           params["lin_w_pad"], params["lin_b_pad"])  # (B, 128)
    return logits_pad[:, :NUM_CLASSES]


if __name__ == "__main__":
    key = jax.random.PRNGKey(0)
    keys = jax.random.split(key, 10)

    B, S, C, Himg, Wimg = 2, 4, 3, 16, 16
    x = jax.random.normal(keys[0], (B, S, C, Himg, Wimg), jnp.float32)

    # deterministic parameter init (shapes mirror the PyTorch module at small size)
    conv_w = jax.random.normal(keys[1], (LATENT, C, KSIZE, KSIZE), jnp.float32) * 0.1
    conv_b = jax.random.normal(keys[2], (LATENT,), jnp.float32) * 0.01
    w_ih = jax.random.normal(keys[3], (4 * HIDDEN, LATENT), jnp.float32) * (LATENT ** -0.5)
    w_hh = jax.random.normal(keys[4], (4 * HIDDEN, HIDDEN), jnp.float32) * (HIDDEN ** -0.5)
    b_ih = jax.random.normal(keys[5], (4 * HIDDEN,), jnp.float32) * 0.01
    b_hh = jax.random.normal(keys[6], (4 * HIDDEN,), jnp.float32) * 0.01
    ln_gamma = jnp.ones((HIDDEN,), jnp.float32)
    ln_beta = jnp.zeros((HIDDEN,), jnp.float32)
    lin_w = jax.random.normal(keys[7], (NUM_CLASSES, HIDDEN), jnp.float32) * 0.05
    lin_b = jax.random.normal(keys[8], (NUM_CLASSES,), jnp.float32) * 0.01

    K = C * KSIZE * KSIZE
    KPAD = -(-K // 8) * 8
    conv_w_mat = conv_w.reshape(LATENT, K).T                     # (K, LATENT)
    conv_w_mat = jnp.pad(conv_w_mat, ((0, KPAD - K), (0, 0)))    # (KPAD, LATENT)

    lin_w_pad = jnp.zeros((HIDDEN, LANE), jnp.float32).at[:, :NUM_CLASSES].set(lin_w.T)
    lin_b_pad = jnp.zeros((1, LANE), jnp.float32).at[0, :NUM_CLASSES].set(lin_b)

    params = dict(
        conv_w_mat=conv_w_mat.astype(jnp.bfloat16),              # (KPAD, LATENT) bf16
        conv_b=conv_b[None, :],                                  # (1, LATENT) f32
        w_ih_t=w_ih.T.astype(jnp.bfloat16),                      # (LATENT, 4H) bf16
        w_hh_t=w_hh.T.astype(jnp.bfloat16),                      # (H, 4H) bf16
        lstm_b=(b_ih + b_hh)[None, :],                           # (1, 4H) f32
        ln_gamma=ln_gamma[None, :],
        ln_beta=ln_beta[None, :],
        lin_w_pad=lin_w_pad,                                     # (H, 128) f32
        lin_b_pad=lin_b_pad,                                     # (1, 128) f32
    )

    out = jax.jit(face_classifier_forward)(x, params)
    jax.block_until_ready(out)
    assert out.shape == (B, NUM_CLASSES) and out.dtype == jnp.float32
    assert bool(jnp.all(jnp.isfinite(out)))
    print("KERNEL_OK")
</pallas_src>

<mosaic_0001>
module attributes {stable_mosaic.version = 11 : i64} {
  func.func @conv_pool_proj_kernel(%arg0: i32, %arg1: memref<512x32xbf16, #tpu.memory_space<vmem>>, %arg2: memref<32x128xbf16, #tpu.memory_space<vmem>>, %arg3: memref<1x128xf32, #tpu.memory_space<vmem>>, %arg4: memref<128x512xbf16, #tpu.memory_space<vmem>>, %arg5: memref<1x512xf32, #tpu.memory_space<vmem>>, %arg6: memref<8x512xf32, #tpu.memory_space<vmem>>) attributes {dimension_semantics = [#tpu.dimension_semantics<parallel>], iteration_bounds = array<i64: 1>, scalar_prefetch = 0 : i64, scratch_operands = 0 : i64, tpu.core_type = #tpu.core_type<tc>, window_params = [{transform_indices = @transform_0, window_bounds = array<i64: 512, 32>}, {pipeline_mode = #tpu.pipeline_mode<synchronous>, transform_indices = @transform_1, window_bounds = array<i64: 32, 128>}, {pipeline_mode = #tpu.pipeline_mode<synchronous>, transform_indices = @transform_2, window_bounds = array<i64: 1, 128>}, {pipeline_mode = #tpu.pipeline_mode<synchronous>, transform_indices = @transform_3, window_bounds = array<i64: 128, 512>}, {pipeline_mode = #tpu.pipeline_mode<synchronous>, transform_indices = @transform_4, window_bounds = array<i64: 1, 512>}, {transform_indices = @transform_5, window_bounds = array<i64: 8, 512>}]} {
    %c0 = arith.constant 0 : index
    %c0_0 = arith.constant 0 : index
    %0 = vector.load %arg1[%c0, %c0_0] : memref<512x32xbf16, #tpu.memory_space<vmem>>, vector<512x32xbf16>
    %c0_1 = arith.constant 0 : index
    %c0_2 = arith.constant 0 : index
    %1 = vector.load %arg2[%c0_1, %c0_2] : memref<32x128xbf16, #tpu.memory_space<vmem>>, vector<32x128xbf16>
    %cst = arith.constant dense<0.000000e+00> : vector<512x128xf32>
    %2 = tpu.matmul %0, %1, %cst {dimension_numbers = #tpu.dot_dimension_numbers<[1], [0], [0], [1], [0, 0, 1, 1], [], []>} : vector<512x32xbf16>, vector<32x128xbf16>, vector<512x128xf32> -> vector<512x128xf32>
    %c0_3 = arith.constant 0 : index
    %c0_4 = arith.constant 0 : index
    %3 = vector.load %arg3[%c0_3, %c0_4] : memref<1x128xf32, #tpu.memory_space<vmem>>, vector<1x128xf32>
    %4 = vector.broadcast %3 : vector<1x128xf32> to vector<512x128xf32>
    %5 = arith.addf %2, %4 : vector<512x128xf32>
    %6 = arith.negf %5 : vector<512x128xf32>
    %7 = math.exp %6 : vector<512x128xf32>
    %cst_5 = arith.constant 1.000000e+00 : f32
    %8 = vector.broadcast %cst_5 : f32 to vector<512x128xf32>
    %9 = arith.addf %8, %7 : vector<512x128xf32>
    %10 = arith.divf %8, %9 : vector<512x128xf32>
    %11 = arith.mulf %5, %10 : vector<512x128xf32>
    %12 = vector.shape_cast %11 : vector<512x128xf32> to vector<8x64x128xf32>
    %cst_6 = arith.constant dense<0.000000e+00> : vector<8x128xf32>
    %13 = vector.multi_reduction <add>, %12, %cst_6 [1] : vector<8x64x128xf32> to vector<8x128xf32>
    %cst_7 = arith.constant 1.562500e-02 : f32
    %14 = vector.broadcast %cst_7 : f32 to vector<8x128xf32>
    %15 = arith.mulf %13, %14 : vector<8x128xf32>
    %16 = arith.truncf %15 : vector<8x128xf32> to vector<8x128xbf16>
    %c0_8 = arith.constant 0 : index
    %c0_9 = arith.constant 0 : index
    %17 = vector.load %arg4[%c0_8, %c0_9] : memref<128x512xbf16, #tpu.memory_space<vmem>>, vector<128x512xbf16>
    %cst_10 = arith.constant dense<0.000000e+00> : vector<8x512xf32>
    %18 = tpu.matmul %16, %17, %cst_10 {dimension_numbers = #tpu.dot_dimension_numbers<[1], [0], [0], [1], [0, 0, 1, 1], [], []>} : vector<8x128xbf16>, vector<128x512xbf16>, vector<8x512xf32> -> vector<8x512xf32>
    %c0_11 = arith.constant 0 : index
    %c0_12 = arith.constant 0 : index
    %19 = vector.load %arg5[%c0_11, %c0_12] : memref<1x512xf32, #tpu.memory_space<vmem>>, vector<1x512xf32>
    %20 = vector.broadcast %19 : vector<1x512xf32> to vector<8x512xf32>
    %21 = arith.addf %18, %20 : vector<8x512xf32>
    %c0_13 = arith.constant 0 : index
    %c0_14 = arith.constant 0 : index
    %22 = vector.load %arg6[%c0_13, %c0_14] : memref<8x512xf32, #tpu.memory_space<vmem>>, vector<8x512xf32>
    tpu.vector_store %arg6[%c0_13, %c0_14], %21 {strides = array<i32>} : memref<8x512xf32, #tpu.memory_space<vmem>>, vector<8x512xf32>,
    return
  }
  func.func @transform_0(%arg0: i32) -> (i32, i32) {
    %c0_i32 = arith.constant 0 : i32
    %c0_i32_0 = arith.constant 0 : i32
    return %arg0, %c0_i32 : i32, i32
  }
  func.func @transform_1(%arg0: i32) -> (i32, i32) {
    %c0_i32 = arith.constant 0 : i32
    %c0_i32_0 = arith.constant 0 : i32
    %c0_i32_1 = arith.constant 0 : i32
    return %c0_i32, %c0_i32_0 : i32, i32
  }
  func.func @transform_2(%arg0: i32) -> (i32, i32) {
    %c0_i32 = arith.constant 0 : i32
    %c0_i32_0 = arith.constant 0 : i32
    %c0_i32_1 = arith.constant 0 : i32
    return %c0_i32, %c0_i32_0 : i32, i32
  }
  func.func @transform_3(%arg0: i32) -> (i32, i32) {
    %c0_i32 = arith.constant 0 : i32
    %c0_i32_0 = arith.constant 0 : i32
    %c0_i32_1 = arith.constant 0 : i32
    return %c0_i32, %c0_i32_0 : i32, i32
  }
  func.func @transform_4(%arg0: i32) -> (i32, i32) {
    %c0_i32 = arith.constant 0 : i32
    %c0_i32_0 = arith.constant 0 : i32
    %c0_i32_1 = arith.constant 0 : i32
    return %c0_i32, %c0_i32_0 : i32, i32
  }
  func.func @transform_5(%arg0: i32) -> (i32, i32) {
    %c0_i32 = arith.constant 0 : i32
    %c0_i32_0 = arith.constant 0 : i32
    return %arg0, %c0_i32 : i32, i32
  }
}

module attributes {stable_mosaic.version = 11 : i64} {
  func.func @lstm_head_kernel(%arg0: i32, %arg1: memref<4x2x512xf32, #tpu.memory_space<vmem>>, %arg2: memref<128x512xbf16, #tpu.memory_space<vmem>>, %arg3: memref<1x128xf32, #tpu.memory_space<vmem>>, %arg4: memref<1x128xf32, #tpu.memory_space<vmem>>, %arg5: memref<128x128xf32, #tpu.memory_space<vmem>>, %arg6: memref<1x128xf32, #tpu.memory_space<vmem>>, %arg7: memref<2x128xf32, #tpu.memory_space<vmem>>) attributes {dimension_semantics = [#tpu.dimension_semantics<arbitrary>], iteration_bounds = array<i64: 1>, scalar_prefetch = 0 : i64, scratch_operands = 0 : i64, tpu.core_type = #tpu.core_type<tc>, window_params = [{pipeline_mode = #tpu.pipeline_mode<synchronous>, transform_indices = @transform_0, window_bounds = array<i64: 4, 2, 512>}, {pipeline_mode = #tpu.pipeline_mode<synchronous>, transform_indices = @transform_1, window_bounds = array<i64: 128, 512>}, {pipeline_mode = #tpu.pipeline_mode<synchronous>, transform_indices = @transform_2, window_bounds = array<i64: 1, 128>}, {pipeline_mode = #tpu.pipeline_mode<synchronous>, transform_indices = @transform_3, window_bounds = array<i64: 1, 128>}, {pipeline_mode = #tpu.pipeline_mode<synchronous>, transform_indices = @transform_4, window_bounds = array<i64: 128, 128>}, {pipeline_mode = #tpu.pipeline_mode<synchronous>, transform_indices = @transform_5, window_bounds = array<i64: 1, 128>}, {pipeline_mode = #tpu.pipeline_mode<synchronous>, transform_indices = @transform_6, window_bounds = array<i64: 2, 128>}]} {
    %c0 = arith.constant 0 : index
    %c0_0 = arith.constant 0 : index
    %0 = vector.load %arg2[%c0, %c0_0] : memref<128x512xbf16, #tpu.memory_space<vmem>>, vector<128x512xbf16>
    %cst = arith.constant 0.000000e+00 : f32
    %1 = vector.broadcast %cst : f32 to vector<2x128xf32>
    %c0_i32 = arith.constant 0 : i32
    %2 = arith.index_cast %c0_i32 : i32 to index
    %c0_1 = arith.constant 0 : index
    %c0_2 = arith.constant 0 : index
    %3 = vector.load %arg1[%2, %c0_1, %c0_2] : memref<4x2x512xf32, #tpu.memory_space<vmem>>, vector<1x2x512xf32>
    %4 = vector.shape_cast %3 : vector<1x2x512xf32> to vector<2x512xf32>
    %5 = arith.truncf %1 : vector<2x128xf32> to vector<2x128xbf16>
    %cst_3 = arith.constant dense<0.000000e+00> : vector<2x512xf32>
    %6 = tpu.matmul %5, %0, %cst_3 {dimension_numbers = #tpu.dot_dimension_numbers<[1], [0], [0], [1], [0, 0, 1, 1], [], []>} : vector<2x128xbf16>, vector<128x512xbf16>, vector<2x512xf32> -> vector<2x512xf32>
    %7 = arith.addf %4, %6 : vector<2x512xf32>
    %8 = vector.extract_strided_slice %7 {offsets = [0, 0], sizes = [2, 128], strides = [1, 1]} : vector<2x512xf32> to vector<2x128xf32>
    %9 = arith.negf %8 : vector<2x128xf32>
    %10 = math.exp %9 : vector<2x128xf32>
    %cst_4 = arith.constant 1.000000e+00 : f32
    %11 = vector.broadcast %cst_4 : f32 to vector<2x128xf32>
    %12 = arith.addf %11, %10 : vector<2x128xf32>
    %13 = arith.divf %11, %12 : vector<2x128xf32>
    %14 = vector.extract_strided_slice %7 {offsets = [0, 128], sizes = [2, 128], strides = [1, 1]} : vector<2x512xf32> to vector<2x128xf32>
    %15 = arith.negf %14 : vector<2x128xf32>
    %16 = math.exp %15 : vector<2x128xf32>
    %cst_5 = arith.constant 1.000000e+00 : f32
    %17 = vector.broadcast %cst_5 : f32 to vector<2x128xf32>
    %18 = arith.addf %17, %16 : vector<2x128xf32>
    %19 = arith.divf %17, %18 : vector<2x128xf32>
    %20 = vector.extract_strided_slice %7 {offsets = [0, 256], sizes = [2, 128], strides = [1, 1]} : vector<2x512xf32> to vector<2x128xf32>
    %21 = math.tanh %20 : vector<2x128xf32>
    %22 = vector.extract_strided_slice %7 {offsets = [0, 384], sizes = [2, 128], strides = [1, 1]} : vector<2x512xf32> to vector<2x128xf32>
    %23 = arith.negf %22 : vector<2x128xf32>
    %24 = math.exp %23 : vector<2x128xf32>
    %cst_6 = arith.constant 1.000000e+00 : f32
    %25 = vector.broadcast %cst_6 : f32 to vector<2x128xf32>
    %26 = arith.addf %25, %24 : vector<2x128xf32>
    %27 = arith.divf %25, %26 : vector<2x128xf32>
    %28 = arith.mulf %19, %1 : vector<2x128xf32>
    %29 = arith.mulf %13, %21 : vector<2x128xf32>
    %30 = arith.addf %28, %29 : vector<2x128xf32>
    %31 = math.tanh %30 : vector<2x128xf32>
    %32 = arith.mulf %27, %31 : vector<2x128xf32>
    %33 = arith.addf %1, %32 : vector<2x128xf32>
    %c1_i32 = arith.constant 1 : i32
    %34 = arith.index_cast %c1_i32 : i32 to index
    %c0_7 = arith.constant 0 : index
    %c0_8 = arith.constant 0 : index
    %35 = vector.load %arg1[%34, %c0_7, %c0_8] : memref<4x2x512xf32, #tpu.memory_space<vmem>>, vector<1x2x512xf32>
    %36 = vector.shape_cast %35 : vector<1x2x512xf32> to vector<2x512xf32>
    %37 = arith.truncf %32 : vector<2x128xf32> to vector<2x128xbf16>
    %cst_9 = arith.constant dense<0.000000e+00> : vector<2x512xf32>
    %38 = tpu.matmul %37, %0, %cst_9 {dimension_numbers = #tpu.dot_dimension_numbers<[1], [0], [0], [1], [0, 0, 1, 1], [], []>} : vector<2x128xbf16>, vector<128x512xbf16>, vector<2x512xf32> -> vector<2x512xf32>
    %39 = arith.addf %36, %38 : vector<2x512xf32>
    %40 = vector.extract_strided_slice %39 {offsets = [0, 0], sizes = [2, 128], strides = [1, 1]} : vector<2x512xf32> to vector<2x128xf32>
    %41 = arith.negf %40 : vector<2x128xf32>
    %42 = math.exp %41 : vector<2x128xf32>
    %cst_10 = arith.constant 1.000000e+00 : f32
    %43 = vector.broadcast %cst_10 : f32 to vector<2x128xf32>
    %44 = arith.addf %43, %42 : vector<2x128xf32>
    %45 = arith.divf %43, %44 : vector<2x128xf32>
    %46 = vector.extract_strided_slice %39 {offsets = [0, 128], sizes = [2, 128], strides = [1, 1]} : vector<2x512xf32> to vector<2x128xf32>
    %47 = arith.negf %46 : vector<2x128xf32>
    %48 = math.exp %47 : vector<2x128xf32>
    %cst_11 = arith.constant 1.000000e+00 : f32
    %49 = vector.broadcast %cst_11 : f32 to vector<2x128xf32>
    %50 = arith.addf %49, %48 : vector<2x128xf32>
    %51 = arith.divf %49, %50 : vector<2x128xf32>
    %52 = vector.extract_strided_slice %39 {offsets = [0, 256], sizes = [2, 128], strides = [1, 1]} : vector<2x512xf32> to vector<2x128xf32>
    %53 = math.tanh %52 : vector<2x128xf32>
    %54 = vector.extract_strided_slice %39 {offsets = [0, 384], sizes = [2, 128], strides = [1, 1]} : vector<2x512xf32> to vector<2x128xf32>
    %55 = arith.negf %54 : vector<2x128xf32>
    %56 = math.exp %55 : vector<2x128xf32>
    %cst_12 = arith.constant 1.000000e+00 : f32
    %57 = vector.broadcast %cst_12 : f32 to vector<2x128xf32>
    %58 = arith.addf %57, %56 : vector<2x128xf32>
    %59 = arith.divf %57, %58 : vector<2x128xf32>
    %60 = arith.mulf %51, %30 : vector<2x128xf32>
    %61 = arith.mulf %45, %53 : vector<2x128xf32>
    %62 = arith.addf %60, %61 : vector<2x128xf32>
    %63 = math.tanh %62 : vector<2x128xf32>
    %64 = arith.mulf %59, %63 : vector<2x128xf32>
    %65 = arith.addf %33, %64 : vector<2x128xf32>
    %c2_i32 = arith.constant 2 : i32
    %66 = arith.index_cast %c2_i32 : i32 to index
    %c0_13 = arith.constant 0 : index
    %c0_14 = arith.constant 0 : index
    %67 = vector.load %arg1[%66, %c0_13, %c0_14] : memref<4x2x512xf32, #tpu.memory_space<vmem>>, vector<1x2x512xf32>
    %68 = vector.shape_cast %67 : vector<1x2x512xf32> to vector<2x512xf32>
    %69 = arith.truncf %64 : vector<2x128xf32> to vector<2x128xbf16>
    %cst_15 = arith.constant dense<0.000000e+00> : vector<2x512xf32>
    %70 = tpu.matmul %69, %0, %cst_15 {dimension_numbers = #tpu.dot_dimension_numbers<[1], [0], [0], [1], [0, 0, 1, 1], [], []>} : vector<2x128xbf16>, vector<128x512xbf16>, vector<2x512xf32> -> vector<2x512xf32>
    %71 = arith.addf %68, %70 : vector<2x512xf32>
    %72 = vector.extract_strided_slice %71 {offsets = [0, 0], sizes = [2, 128], strides = [1, 1]} : vector<2x512xf32> to vector<2x128xf32>
    %73 = arith.negf %72 : vector<2x128xf32>
    %74 = math.exp %73 : vector<2x128xf32>
    %cst_16 = arith.constant 1.000000e+00 : f32
    %75 = vector.broadcast %cst_16 : f32 to vector<2x128xf32>
    %76 = arith.addf %75, %74 : vector<2x128xf32>
    %77 = arith.divf %75, %76 : vector<2x128xf32>
    %78 = vector.extract_strided_slice %71 {offsets = [0, 128], sizes = [2, 128], strides = [1, 1]} : vector<2x512xf32> to vector<2x128xf32>
    %79 = arith.negf %78 : vector<2x128xf32>
    %80 = math.exp %79 : vector<2x128xf32>
    %cst_17 = arith.constant 1.000000e+00 : f32
    %81 = vector.broadcast %cst_17 : f32 to vector<2x128xf32>
    %82 = arith.addf %81, %80 : vector<2x128xf32>
    %83 = arith.divf %81, %82 : vector<2x128xf32>
    %84 = vector.extract_strided_slice %71 {offsets = [0, 256], sizes = [2, 128], strides = [1, 1]} : vector<2x512xf32> to vector<2x128xf32>
    %85 = math.tanh %84 : vector<2x128xf32>
    %86 = vector.extract_strided_slice %71 {offsets = [0, 384], sizes = [2, 128], strides = [1, 1]} : vector<2x512xf32> to vector<2x128xf32>
    %87 = arith.negf %86 : vector<2x128xf32>
    %88 = math.exp %87 : vector<2x128xf32>
    %cst_18 = arith.constant 1.000000e+00 : f32
    %89 = vector.broadcast %cst_18 : f32 to vector<2x128xf32>
    %90 = arith.addf %89, %88 : vector<2x128xf32>
    %91 = arith.divf %89, %90 : vector<2x128xf32>
    %92 = arith.mulf %83, %62 : vector<2x128xf32>
    %93 = arith.mulf %77, %85 : vector<2x128xf32>
    %94 = arith.addf %92, %93 : vector<2x128xf32>
    %95 = math.tanh %94 : vector<2x128xf32>
    %96 = arith.mulf %91, %95 : vector<2x128xf32>
    %97 = arith.addf %65, %96 : vector<2x128xf32>
    %c3_i32 = arith.constant 3 : i32
    %98 = arith.index_cast %c3_i32 : i32 to index
    %c0_19 = arith.constant 0 : index
    %c0_20 = arith.constant 0 : index
    %99 = vector.load %arg1[%98, %c0_19, %c0_20] : memref<4x2x512xf32, #tpu.memory_space<vmem>>, vector<1x2x512xf32>
    %100 = vector.shape_cast %99 : vector<1x2x512xf32> to vector<2x512xf32>
    %101 = arith.truncf %96 : vector<2x128xf32> to vector<2x128xbf16>
    %cst_21 = arith.constant dense<0.000000e+00> : vector<2x512xf32>
    %102 = tpu.matmul %101, %0, %cst_21 {dimension_numbers = #tpu.dot_dimension_numbers<[1], [0], [0], [1], [0, 0, 1, 1], [], []>} : vector<2x128xbf16>, vector<128x512xbf16>, vector<2x512xf32> -> vector<2x512xf32>
    %103 = arith.addf %100, %102 : vector<2x512xf32>
    %104 = vector.extract_strided_slice %103 {offsets = [0, 0], sizes = [2, 128], strides = [1, 1]} : vector<2x512xf32> to vector<2x128xf32>
    %105 = arith.negf %104 : vector<2x128xf32>
    %106 = math.exp %105 : vector<2x128xf32>
    %cst_22 = arith.constant 1.000000e+00 : f32
    %107 = vector.broadcast %cst_22 : f32 to vector<2x128xf32>
    %108 = arith.addf %107, %106 : vector<2x128xf32>
    %109 = arith.divf %107, %108 : vector<2x128xf32>
    %110 = vector.extract_strided_slice %103 {offsets = [0, 128], sizes = [2, 128], strides = [1, 1]} : vector<2x512xf32> to vector<2x128xf32>
    %111 = arith.negf %110 : vector<2x128xf32>
    %112 = math.exp %111 : vector<2x128xf32>
    %cst_23 = arith.constant 1.000000e+00 : f32
    %113 = vector.broadcast %cst_23 : f32 to vector<2x128xf32>
    %114 = arith.addf %113, %112 : vector<2x128xf32>
    %115 = arith.divf %113, %114 : vector<2x128xf32>
    %116 = vector.extract_strided_slice %103 {offsets = [0, 256], sizes = [2, 128], strides = [1, 1]} : vector<2x512xf32> to vector<2x128xf32>
    %117 = math.tanh %116 : vector<2x128xf32>
    %118 = vector.extract_strided_slice %103 {offsets = [0, 384], sizes = [2, 128], strides = [1, 1]} : vector<2x512xf32> to vector<2x128xf32>
    %119 = arith.negf %118 : vector<2x128xf32>
    %120 = math.exp %119 : vector<2x128xf32>
    %cst_24 = arith.constant 1.000000e+00 : f32
    %121 = vector.broadcast %cst_24 : f32 to vector<2x128xf32>
    %122 = arith.addf %121, %120 : vector<2x128xf32>
    %123 = arith.divf %121, %122 : vector<2x128xf32>
    %124 = arith.mulf %115, %94 : vector<2x128xf32>
    %125 = arith.mulf %109, %117 : vector<2x128xf32>
    %126 = arith.addf %124, %125 : vector<2x128xf32>
    %127 = math.tanh %126 : vector<2x128xf32>
    %128 = arith.mulf %123, %127 : vector<2x128xf32>
    %129 = arith.addf %97, %128 : vector<2x128xf32>
    %c4_i32 = arith.constant 4 : i32
    %cst_25 = arith.constant 2.500000e-01 : f32
    %130 = vector.broadcast %cst_25 : f32 to vector<2x128xf32>
    %131 = arith.mulf %129, %130 : vector<2x128xf32>
    %cst_26 = arith.constant dense<0.000000e+00> : vector<2xf32>
    %132 = vector.multi_reduction <add>, %131, %cst_26 [1] : vector<2x128xf32> to vector<2xf32>
    %133 = vector.shape_cast %132 : vector<2xf32> to vector<2x1xf32>
    %cst_27 = arith.constant 1.280000e+02 : f32
    %134 = vector.broadcast %cst_27 : f32 to vector<2x1xf32>
    %135 = arith.divf %133, %134 : vector<2x1xf32>
    %136 = vector.broadcast %135 : vector<2x1xf32> to vector<2x128xf32>
    %137 = arith.subf %131, %136 : vector<2x128xf32>
    %138 = arith.mulf %137, %137 : vector<2x128xf32>
    %cst_28 = arith.constant dense<0.000000e+00> : vector<2xf32>
    %139 = vector.multi_reduction <add>, %138, %cst_28 [1] : vector<2x128xf32> to vector<2xf32>
    %140 = vector.shape_cast %139 : vector<2xf32> to vector<2x1xf32>
    %cst_29 = arith.constant 1.280000e+02 : f32
    %141 = vector.broadcast %cst_29 : f32 to vector<2x1xf32>
    %142 = arith.divf %140, %141 : vector<2x1xf32>
    %143 = vector.broadcast %135 : vector<2x1xf32> to vector<2x128xf32>
    %144 = arith.subf %131, %143 : vector<2x128xf32>
    %cst_30 = arith.constant 9.99999974E-6 : f32
    %145 = vector.broadcast %cst_30 : f32 to vector<2x1xf32>
    %146 = arith.addf %142, %145 : vector<2x1xf32>
    %147 = math.rsqrt %146 : vector<2x1xf32>
    %148 = vector.broadcast %147 : vector<2x1xf32> to vector<2x128xf32>
    %149 = arith.mulf %144, %148 : vector<2x128xf32>
    %c0_31 = arith.constant 0 : index
    %c0_32 = arith.constant 0 : index
    %150 = vector.load %arg3[%c0_31, %c0_32] : memref<1x128xf32, #tpu.memory_space<vmem>>, vector<1x128xf32>
    %151 = vector.broadcast %150 : vector<1x128xf32> to vector<2x128xf32>
    %152 = arith.mulf %149, %151 : vector<2x128xf32>
    %c0_33 = arith.constant 0 : index
    %c0_34 = arith.constant 0 : index
    %153 = vector.load %arg4[%c0_33, %c0_34] : memref<1x128xf32, #tpu.memory_space<vmem>>, vector<1x128xf32>
    %154 = vector.broadcast %153 : vector<1x128xf32> to vector<2x128xf32>
    %155 = arith.addf %152, %154 : vector<2x128xf32>
    %cst_35 = arith.constant 0.000000e+00 : f32
    %156 = vector.broadcast %cst_35 : f32 to vector<2x128xf32>
    %157 = arith.cmpf oge, %155, %156 : vector<2x128xf32>
    %cst_36 = arith.constant 0.00999999977 : f32
    %158 = vector.broadcast %cst_36 : f32 to vector<2x128xf32>
    %159 = arith.mulf %158, %155 : vector<2x128xf32>
    %160 = arith.select %157, %155, %159 : vector<2x128xi1>, vector<2x128xf32>
    %c0_37 = arith.constant 0 : index
    %c0_38 = arith.constant 0 : index
    %161 = vector.load %arg5[%c0_37, %c0_38] : memref<128x128xf32, #tpu.memory_space<vmem>>, vector<128x128xf32>
    %cst_39 = arith.constant dense<0.000000e+00> : vector<2x128xf32>
    %162 = tpu.matmul %160, %161, %cst_39 {dimension_numbers = #tpu.dot_dimension_numbers<[1], [0], [0], [1], [0, 0, 1, 1], [], []>} : vector<2x128xf32>, vector<128x128xf32>, vector<2x128xf32> -> vector<2x128xf32>
    %c0_40 = arith.constant 0 : index
    %c0_41 = arith.constant 0 : index
    %163 = vector.load %arg6[%c0_40, %c0_41] : memref<1x128xf32, #tpu.memory_space<vmem>>, vector<1x128xf32>
    %164 = vector.broadcast %163 : vector<1x128xf32> to vector<2x128xf32>
    %165 = arith.addf %162, %164 : vector<2x128xf32>
    %c0_42 = arith.constant 0 : index
    %c0_43 = arith.constant 0 : index
    %166 = vector.load %arg7[%c0_42, %c0_43] : memref<2x128xf32, #tpu.memory_space<vmem>>, vector<2x128xf32>
    tpu.vector_store %arg7[%c0_42, %c0_43], %165 {strides = array<i32>} : memref<2x128xf32, #tpu.memory_space<vmem>>, vector<2x128xf32>,
    return
  }
  func.func @transform_0(%arg0: i32) -> (i32, i32, i32) {
    %c0_i32 = arith.constant 0 : i32
    %c0_i32_0 = arith.constant 0 : i32
    %c0_i32_1 = arith.constant 0 : i32
    %c0_i32_2 = arith.constant 0 : i32
    return %c0_i32, %c0_i32_0, %c0_i32_1 : i32, i32, i32
  }
  func.func @transform_1(%arg0: i32) -> (i32, i32) {
    %c0_i32 = arith.constant 0 : i32
    %c0_i32_0 = arith.constant 0 : i32
    %c0_i32_1 = arith.constant 0 : i32
    return %c0_i32, %c0_i32_0 : i32, i32
  }
  func.func @transform_2(%arg0: i32) -> (i32, i32) {
    %c0_i32 = arith.constant 0 : i32
    %c0_i32_0 = arith.constant 0 : i32
    %c0_i32_1 = arith.constant 0 : i32
    return %c0_i32, %c0_i32_0 : i32, i32
  }
  func.func @transform_3(%arg0: i32) -> (i32, i32) {
    %c0_i32 = arith.constant 0 : i32
    %c0_i32_0 = arith.constant 0 : i32
    %c0_i32_1 = arith.constant 0 : i32
    return %c0_i32, %c0_i32_0 : i32, i32
  }
  func.func @transform_4(%arg0: i32) -> (i32, i32) {
    %c0_i32 = arith.constant 0 : i32
    %c0_i32_0 = arith.constant 0 : i32
    %c0_i32_1 = arith.constant 0 : i32
    return %c0_i32, %c0_i32_0 : i32, i32
  }
  func.func @transform_5(%arg0: i32) -> (i32, i32) {
    %c0_i32 = arith.constant 0 : i32
    %c0_i32_0 = arith.constant 0 : i32
    %c0_i32_1 = arith.constant 0 : i32
    return %c0_i32, %c0_i32_0 : i32, i32
  }
  func.func @transform_6(%arg0: i32) -> (i32, i32) {
    %c0_i32 = arith.constant 0 : i32
    %c0_i32_0 = arith.constant 0 : i32
    %c0_i32_1 = arith.constant 0 : i32
    return %c0_i32, %c0_i32_0 : i32, i32
  }
}

</mosaic_0001>

<llo_original>
// kernel: face_classifier_forward.2
$region0: #{face_classifier_forward.2}
  #allocation0 [shape = 'u32[]', space=smem, size = 0x4, offset = 0x4, fixed_abs, tag = 'smem constant byte address 0x4 - core index']
  #allocation1 [shape = 'u32[144,128]{1,0:T(1,128)}', space=vmem, size = 0x12000, scoped, tag = 'internal scratch']
  %s0 = inlined_call_operand.vmem [shape: bf16[512,32], index: 0, kind: input, shape index: {}]
  %s1 = inlined_call_operand.vmem [shape: bf16[32,128], index: 1, kind: input, shape index: {}]
  %s2 = inlined_call_operand.vmem [shape: f32[1,128], index: 2, kind: input, shape index: {}]
  %s3 = inlined_call_operand.vmem [shape: bf16[128,512], index: 3, kind: input, shape index: {}]
  %s4 = inlined_call_operand.vmem [shape: f32[1,512], index: 4, kind: input, shape index: {}]
  %s5 = inlined_call_operand.vmem [shape: f32[8,512], index: 5, kind: output, shape index: {}]
  %s6 = sld [smem:[#allocation0]]
  $region30: #{face_classifier_forward.2} parent=0
    _
  %s8 = ssub.s32 1, %s6
  %s9 = scalar_select 0, %s8, %s6
  // Predicated region
  $region2: #{face_classifier_forward.2} parent=0 // pred_check
    _
  $region3: #{face_classifier_forward.2} parent=0 // pred_check_branch
    %11 = sbr.rel (0) target = $region5
  $region4: #{face_classifier_forward.2} parent=0 // pred_region
    _
  $region5: #{face_classifier_forward.2} parent=0 // pred_fallthru
    _
  // Predicated region
  $region6: #{face_classifier_forward.2} parent=0 // pred_check
    _
  $region7: #{face_classifier_forward.2} parent=0 // pred_check_branch
    %13 = sbr.rel (0) target = $region9
  $region8: #{face_classifier_forward.2} parent=0 // pred_region
    _
  $region9: #{face_classifier_forward.2} parent=0 // pred_fallthru
    _
  // Predicated region
  $region10: #{face_classifier_forward.2} parent=0 // pred_check
    _
  $region11: #{face_classifier_forward.2} parent=0 // pred_check_branch
    %15 = sbr.rel (0) target = $region13
  $region12: #{face_classifier_forward.2} parent=0 // pred_region
    _
  $region13: #{face_classifier_forward.2} parent=0 // pred_fallthru
    _
  // Predicated region
  $region14: #{face_classifier_forward.2} parent=0 // pred_check
    _
  $region15: #{face_classifier_forward.2} parent=0 // pred_check_branch
    %17 = sbr.rel (0) target = $region17
  $region16: #{face_classifier_forward.2} parent=0 // pred_region
    _
  $region17: #{face_classifier_forward.2} parent=0 // pred_fallthru
    _
  // Predicated region
  $region18: #{face_classifier_forward.2} parent=0 // pred_check
    _
  $region19: #{face_classifier_forward.2} parent=0 // pred_check_branch
    %19 = sbr.rel (0) target = $region21
  $region20: #{face_classifier_forward.2} parent=0 // pred_region
    _
  $region21: #{face_classifier_forward.2} parent=0 // pred_fallthru
    _
  %v21 = vld [vmem:[%s0] sm:$0xf]
  %v22 = vld [vmem:[%s0 + $0x4] sm:$0xf]
  %v23 = vld [vmem:[%s0 + $0x8] sm:$0xf]
  %v24 = vld [vmem:[%s0 + $0xc] sm:$0xf]
  %v25 = vld [vmem:[%s0 + $0x10] sm:$0xf]
  %v26 = vld [vmem:[%s0 + $0x14] sm:$0xf]
  %v27 = vld [vmem:[%s0 + $0x18] sm:$0xf]
  %v28 = vld [vmem:[%s0 + $0x1c] sm:$0xf]
  %v29 = vld [vmem:[%s0 + $0x20] sm:$0xf]
  %v30 = vld [vmem:[%s0 + $0x24] sm:$0xf]
  %v31 = vld [vmem:[%s0 + $0x28] sm:$0xf]
  %v32 = vld [vmem:[%s0 + $0x2c] sm:$0xf]
  %v33 = vld [vmem:[%s0 + $0x30] sm:$0xf]
  %v34 = vld [vmem:[%s0 + $0x34] sm:$0xf]
  %v35 = vld [vmem:[%s0 + $0x38] sm:$0xf]
  %v36 = vld [vmem:[%s0 + $0x3c] sm:$0xf]
  %v37 = vld [vmem:[%s0 + $0x40] sm:$0xf]
  %v38 = vld [vmem:[%s0 + $0x44] sm:$0xf]
  %v39 = vld [vmem:[%s0 + $0x48] sm:$0xf]
  %v40 = vld [vmem:[%s0 + $0x4c] sm:$0xf]
  %v41 = vld [vmem:[%s0 + $0x50] sm:$0xf]
  %v42 = vld [vmem:[%s0 + $0x54] sm:$0xf]
  %v43 = vld [vmem:[%s0 + $0x58] sm:$0xf]
  %v44 = vld [vmem:[%s0 + $0x5c] sm:$0xf]
  %v45 = vld [vmem:[%s0 + $0x60] sm:$0xf]
  %v46 = vld [vmem:[%s0 + $0x64] sm:$0xf]
  %v47 = vld [vmem:[%s0 + $0x68] sm:$0xf]
  %v48 = vld [vmem:[%s0 + $0x6c] sm:$0xf]
  %v49 = vld [vmem:[%s0 + $0x70] sm:$0xf]
  %v50 = vld [vmem:[%s0 + $0x74] sm:$0xf]
  %v51 = vld [vmem:[%s0 + $0x78] sm:$0xf]
  %v52 = vld [vmem:[%s0 + $0x7c] sm:$0xf]
  %v53 = vld [vmem:[%s0 + $0x80] sm:$0xf]
  %v54 = vld [vmem:[%s0 + $0x84] sm:$0xf]
  %v55 = vld [vmem:[%s0 + $0x88] sm:$0xf]
  %v56 = vld [vmem:[%s0 + $0x8c] sm:$0xf]
  %v57 = vld [vmem:[%s0 + $0x90] sm:$0xf]
  %v58 = vld [vmem:[%s0 + $0x94] sm:$0xf]
  %v59 = vld [vmem:[%s0 + $0x98] sm:$0xf]
  %v60 = vld [vmem:[%s0 + $0x9c] sm:$0xf]
  %v61 = vld [vmem:[%s0 + $0xa0] sm:$0xf]
  %v62 = vld [vmem:[%s0 + $0xa4] sm:$0xf]
  %v63 = vld [vmem:[%s0 + $0xa8] sm:$0xf]
  %v64 = vld [vmem:[%s0 + $0xac] sm:$0xf]
  %v65 = vld [vmem:[%s0 + $0xb0] sm:$0xf]
  %v66 = vld [vmem:[%s0 + $0xb4] sm:$0xf]
  %v67 = vld [vmem:[%s0 + $0xb8] sm:$0xf]
  %v68 = vld [vmem:[%s0 + $0xbc] sm:$0xf]
  %v69 = vld [vmem:[%s0 + $0xc0] sm:$0xf]
  %v70 = vld [vmem:[%s0 + $0xc4] sm:$0xf]
  %v71 = vld [vmem:[%s0 + $0xc8] sm:$0xf]
  %v72 = vld [vmem:[%s0 + $0xcc] sm:$0xf]
  %v73 = vld [vmem:[%s0 + $0xd0] sm:$0xf]
  %v74 = vld [vmem:[%s0 + $0xd4] sm:$0xf]
  %v75 = vld [vmem:[%s0 + $0xd8] sm:$0xf]
  %v76 = vld [vmem:[%s0 + $0xdc] sm:$0xf]
  %v77 = vld [vmem:[%s0 + $0xe0] sm:$0xf]
  %v78 = vld [vmem:[%s0 + $0xe4] sm:$0xf]
  %v79 = vld [vmem:[%s0 + $0xe8] sm:$0xf]
  %v80 = vld [vmem:[%s0 + $0xec] sm:$0xf]
  %v81 = vld [vmem:[%s0 + $0xf0] sm:$0xf]
  %v82 = vld [vmem:[%s0 + $0xf4] sm:$0xf]
  %v83 = vld [vmem:[%s0 + $0xf8] sm:$0xf]
  %v84 = vld [vmem:[%s0 + $0xfc] sm:$0xf]
  %v85 = vld [vmem:[%s1] sm:$0xf]
  %v86 = vld [vmem:[%s1 + $0x4] sm:$0xf]
  %v87 = vld [vmem:[%s1 + $0x8] sm:$0xf]
  %v88 = vld [vmem:[%s1 + $0xc] sm:$0xf]
  %v89 = vld [vmem:[%s2] sm:$0x1]
  %v91 = vlaneseq
  %v92 = vshrl.u32 %v91, 7
  %v93 = vsub.s32 0, %v92
  %v94 = vrot.slane %v89, %v93
  %v160 = vunpack.c.l.b16 %v21
  %v161 = vunpack.c.l.b16 %v22
  %v162 = vunpack.c.l.b16 %v23
  %v163 = vunpack.c.l.b16 %v24
  %v164 = vunpack.c.l.b16 %v25
  %v165 = vunpack.c.l.b16 %v26
  %v166 = vunpack.c.l.b16 %v27
  %v167 = vunpack.c.l.b16 %v28
  %v168 = vunpack.c.l.b16 %v29
  %v169 = vunpack.c.l.b16 %v30
  %v170 = vunpack.c.l.b16 %v31
  %v171 = vunpack.c.l.b16 %v32
  %v172 = vunpack.c.l.b16 %v33
  %v173 = vunpack.c.l.b16 %v34
  %v174 = vunpack.c.l.b16 %v35
  %v175 = vunpack.c.l.b16 %v36
  %v176 = vunpack.c.l.b16 %v37
  %v177 = vunpack.c.l.b16 %v38
  %v178 = vunpack.c.l.b16 %v39
  %v179 = vunpack.c.l.b16 %v40
  %v180 = vunpack.c.l.b16 %v41
  %v181 = vunpack.c.l.b16 %v42
  %v182 = vunpack.c.l.b16 %v43
  %v183 = vunpack.c.l.b16 %v44
  %v184 = vunpack.c.l.b16 %v45
  %v185 = vunpack.c.l.b16 %v46
  %v186 = vunpack.c.l.b16 %v47
  %v187 = vunpack.c.l.b16 %v48
  %v188 = vunpack.c.l.b16 %v49
  %v189 = vunpack.c.l.b16 %v50
  %v190 = vunpack.c.l.b16 %v51
  %v191 = vunpack.c.l.b16 %v52
  %v192 = vunpack.c.l.b16 %v53
  %v193 = vunpack.c.l.b16 %v54
  %v194 = vunpack.c.l.b16 %v55
  %v195 = vunpack.c.l.b16 %v56
  %v196 = vunpack.c.l.b16 %v57
  %v197 = vunpack.c.l.b16 %v58
  %v198 = vunpack.c.l.b16 %v59
  %v199 = vunpack.c.l.b16 %v60
  %v200 = vunpack.c.l.b16 %v61
  %v201 = vunpack.c.l.b16 %v62
  %v202 = vunpack.c.l.b16 %v63
  %v203 = vunpack.c.l.b16 %v64
  %v204 = vunpack.c.l.b16 %v65
  %v205 = vunpack.c.l.b16 %v66
  %v206 = vunpack.c.l.b16 %v67
  %v207 = vunpack.c.l.b16 %v68
  %v208 = vunpack.c.l.b16 %v69
  %v209 = vunpack.c.l.b16 %v70
  %v210 = vunpack.c.l.b16 %v71
  %v211 = vunpack.c.l.b16 %v72
  %v212 = vunpack.c.l.b16 %v73
  %v213 = vunpack.c.l.b16 %v74
  %v214 = vunpack.c.l.b16 %v75
  %v215 = vunpack.c.l.b16 %v76
  %v216 = vunpack.c.l.b16 %v77
  %v217 = vunpack.c.l.b16 %v78
  %v218 = vunpack.c.l.b16 %v79
  %v219 = vunpack.c.l.b16 %v80
  %v220 = vunpack.c.l.b16 %v81
  %v221 = vunpack.c.l.b16 %v82
  %v222 = vunpack.c.l.b16 %v83
  %v223 = vunpack.c.l.b16 %v84
  %v224 = vpack.c.b16 %v161, %v160
  %v225 = vpack.c.b16 %v163, %v162
  %v226 = vpack.c.b16 %v165, %v164
  %v227 = vpack.c.b16 %v167, %v166
  %v228 = vpack.c.b16 %v169, %v168
  %v229 = vpack.c.b16 %v171, %v170
  %v230 = vpack.c.b16 %v173, %v172
  %v231 = vpack.c.b16 %v175, %v174
  %v232 = vpack.c.b16 %v177, %v176
  %v233 = vpack.c.b16 %v179, %v178
  %v234 = vpack.c.b16 %v181, %v180
  %v235 = vpack.c.b16 %v183, %v182
  %v236 = vpack.c.b16 %v185, %v184
  %v237 = vpack.c.b16 %v187, %v186
  %v238 = vpack.c.b16 %v189, %v188
  %v239 = vpack.c.b16 %v191, %v190
  %v240 = vpack.c.b16 %v193, %v192
  %v241 = vpack.c.b16 %v195, %v194
  %v242 = vpack.c.b16 %v197, %v196
  %v243 = vpack.c.b16 %v199, %v198
  %v244 = vpack.c.b16 %v201, %v200
  %v245 = vpack.c.b16 %v203, %v202
  %v246 = vpack.c.b16 %v205, %v204
  %v247 = vpack.c.b16 %v207, %v206
  %v248 = vpack.c.b16 %v209, %v208
  %v249 = vpack.c.b16 %v211, %v210
  %v250 = vpack.c.b16 %v213, %v212
  %v251 = vpack.c.b16 %v215, %v214
  %v252 = vpack.c.b16 %v217, %v216
  %v253 = vpack.c.b16 %v219, %v218
  %v254 = vpack.c.b16 %v221, %v220
  %v255 = vpack.c.b16 %v223, %v222
  %v260 = vunpack.c.l.b16 %v85
  %v261 = vunpack.c.l.b16 %v86
  %v262 = vunpack.c.l.b16 %v87
  %v263 = vunpack.c.l.b16 %v88
  %v264 = vpack.c.b16 %v261, %v260
  %v265 = vpack.c.b16 %v263, %v262
  %vm268 = vcmask 261120
  %v270 = vsel %vm268, %v224, 0
  %v273 = vsel %vm268, %v225, 0
  %v276 = vsel %vm268, %v226, 0
  %v279 = vsel %vm268, %v227, 0
  %v282 = vsel %vm268, %v228, 0
  %v285 = vsel %vm268, %v229, 0
  %v288 = vsel %vm268, %v230, 0
  %v291 = vsel %vm268, %v231, 0
  %v294 = vsel %vm268, %v232, 0
  %v297 = vsel %vm268, %v233, 0
  %v300 = vsel %vm268, %v234, 0
  %v303 = vsel %vm268, %v235, 0
  %v306 = vsel %vm268, %v236, 0
  %v309 = vsel %vm268, %v237, 0
  %v312 = vsel %vm268, %v238, 0
  %v315 = vsel %vm268, %v239, 0
  %v318 = vsel %vm268, %v240, 0
  %v321 = vsel %vm268, %v241, 0
  %v324 = vsel %vm268, %v242, 0
  %v327 = vsel %vm268, %v243, 0
  %v330 = vsel %vm268, %v244, 0
  %v333 = vsel %vm268, %v245, 0
  %v336 = vsel %vm268, %v246, 0
  %v339 = vsel %vm268, %v247, 0
  %v342 = vsel %vm268, %v248, 0
  %v345 = vsel %vm268, %v249, 0
  %v348 = vsel %vm268, %v250, 0
  %v351 = vsel %vm268, %v251, 0
  %v354 = vsel %vm268, %v252, 0
  %v357 = vsel %vm268, %v253, 0
  %v360 = vsel %vm268, %v254, 0
  %v363 = vsel %vm268, %v255, 0
  %365 = vmatprep.subr.bf16.mxu0 0
  %366 = vmatpush1.bf16.msra.mxu0 %v264
  %367 = vmatprep.subr.bf16.mxu0 0
  %368 = vmatpush1.bf16.msra.mxu0 %v265
  %369 = vmatprep.subr.bf16.mxu0 0
  %370 = vmatpush1.bf16.msra.mxu0 0
  %371 = vmatprep.subr.bf16.mxu0 0
  %372 = vmatpush1.bf16.msra.mxu0 0
  %373 = vmatprep.subr.bf16.mxu0 0
  %374 = vmatpush1.bf16.msra.mxu0 0
  %375 = vmatprep.subr.bf16.mxu0 0
  %376 = vmatpush1.bf16.msra.mxu0 0
  %377 = vmatprep.subr.bf16.mxu0 0
  %378 = vmatpush1.bf16.msra.mxu0 0
  %379 = vmatprep.subr.bf16.mxu0 0
  %380 = vmatpush1.bf16.msra.mxu0 0
  %381 = vmatprep.subr.bf16.mxu0 0
  %382 = vmatpush1.bf16.msra.mxu0 0
  %383 = vmatprep.subr.bf16.mxu0 0
  %384 = vmatpush1.bf16.msra.mxu0 0
  %385 = vmatprep.subr.bf16.mxu0 0
  %386 = vmatpush1.bf16.msra.mxu0 0
  %387 = vmatprep.subr.bf16.mxu0 0
  %388 = vmatpush1.bf16.msra.mxu0 0
  %389 = vmatprep.subr.bf16.mxu0 0
  %390 = vmatpush1.bf16.msra.mxu0 0
  %391 = vmatprep.subr.bf16.mxu0 0
  %392 = vmatpush1.bf16.msra.mxu0 0
  %393 = vmatprep.subr.bf16.mxu0 0
  %394 = vmatpush1.bf16.msra.mxu0 0
  %395 = vmatprep.subr.bf16.mxu0 0
  %396 = vmatpush1.bf16.msra.mxu0 0
  %397 = vmatprep.mubr.bf16.mxu0 0
  %398 = vmatmul.mubr.bf16.gmra.mrb[0].mxu0 %v270
  %v399 = vpop.f32.mrb[0].mxu0
  %v400 = vadd.f32 %v94, %v399
  %v401 = vpop.f32.mrb[0].mxu0
  %v402 = vpop.f32.mrb[0].mxu0
  %v403 = vadd.f32 %v94, %v402
  %v404 = vpop.f32.mrb[0].mxu0
  %405 = vmatprep.mubr.bf16.mxu0 0
  %406 = vmatmul.mubr.bf16.gmra.mrb[0].mxu0 %v273
  %v407 = vpop.f32.mrb[0].mxu0
  %v408 = vadd.f32 %v94, %v407
  %v409 = vpop.f32.mrb[0].mxu0
  %v410 = vpop.f32.mrb[0].mxu0
  %v411 = vadd.f32 %v94, %v410
  %v412 = vpop.f32.mrb[0].mxu0
  %413 = vmatprep.mubr.bf16.mxu0 0
  %414 = vmatmul.mubr.bf16.gmra.mrb[0].mxu0 %v276
  %v415 = vpop.f32.mrb[0].mxu0
  %v416 = vadd.f32 %v94, %v415
  %v417 = vpop.f32.mrb[0].mxu0
  %v418 = vpop.f32.mrb[0].mxu0
  %v419 = vadd.f32 %v94, %v418
  %v420 = vpop.f32.mrb[0].mxu0
  %421 = vmatprep.mubr.bf16.mxu0 0
  %422 = vmatmul.mubr.bf16.gmra.mrb[0].mxu0 %v279
  %v423 = vpop.f32.mrb[0].mxu0
  %v424 = vadd.f32 %v94, %v423
  %v425 = vpop.f32.mrb[0].mxu0
  %v426 = vpop.f32.mrb[0].mxu0
  %v427 = vadd.f32 %v94, %v426
  %v428 = vpop.f32.mrb[0].mxu0
  %429 = vmatprep.mubr.bf16.mxu0 0
  %430 = vmatmul.mubr.bf16.gmra.mrb[0].mxu0 %v282
  %v431 = vpop.f32.mrb[0].mxu0
  %v432 = vadd.f32 %v94, %v431
  %v433 = vpop.f32.mrb[0].mxu0
  %v434 = vpop.f32.mrb[0].mxu0
  %v435 = vadd.f32 %v94, %v434
  %v436 = vpop.f32.mrb[0].mxu0
  %437 = vmatprep.mubr.bf16.mxu0 0
  %438 = vmatmul.mubr.bf16.gmra.mrb[0].mxu0 %v285
  %v439 = vpop.f32.mrb[0].mxu0
  %v440 = vadd.f32 %v94, %v439
  %v441 = vpop.f32.mrb[0].mxu0
  %v442 = vpop.f32.mrb[0].mxu0
  %v443 = vadd.f32 %v94, %v442
  %v444 = vpop.f32.mrb[0].mxu0
  %445 = vmatprep.mubr.bf16.mxu0 0
  %446 = vmatmul.mubr.bf16.gmra.mrb[0].mxu0 %v288
  %v447 = vpop.f32.mrb[0].mxu0
  %v448 = vadd.f32 %v94, %v447
  %v449 = vpop.f32.mrb[0].mxu0
  %v450 = vpop.f32.mrb[0].mxu0
  %v451 = vadd.f32 %v94, %v450
  %v452 = vpop.f32.mrb[0].mxu0
  %453 = vmatprep.mubr.bf16.mxu0 0
  %454 = vmatmul.mubr.bf16.gmra.mrb[0].mxu0 %v291
  %v455 = vpop.f32.mrb[0].mxu0
  %v456 = vadd.f32 %v94, %v455
  %v457 = vpop.f32.mrb[0].mxu0
  %v458 = vpop.f32.mrb[0].mxu0
  %v459 = vadd.f32 %v94, %v458
  %v460 = vpop.f32.mrb[0].mxu0
  %461 = vmatprep.mubr.bf16.mxu0 0
  %462 = vmatmul.mubr.bf16.gmra.mrb[0].mxu0 %v294
  %v463 = vpop.f32.mrb[0].mxu0
  %v464 = vadd.f32 %v94, %v463
  %v465 = vpop.f32.mrb[0].mxu0
  %v466 = vpop.f32.mrb[0].mxu0
  %v467 = vadd.f32 %v94, %v466
  %v468 = vpop.f32.mrb[0].mxu0
  %469 = vmatprep.mubr.bf16.mxu0 0
  %470 = vmatmul.mubr.bf16.gmra.mrb[0].mxu0 %v297
  %v471 = vpop.f32.mrb[0].mxu0
  %v472 = vadd.f32 %v94, %v471
  %v473 = vpop.f32.mrb[0].mxu0
  %v474 = vpop.f32.mrb[0].mxu0
  %v475 = vadd.f32 %v94, %v474
  %v476 = vpop.f32.mrb[0].mxu0
  %477 = vmatprep.mubr.bf16.mxu0 0
  %478 = vmatmul.mubr.bf16.gmra.mrb[0].mxu0 %v300
  %v479 = vpop.f32.mrb[0].mxu0
  %v480 = vadd.f32 %v94, %v479
  %v481 = vpop.f32.mrb[0].mxu0
  %v482 = vpop.f32.mrb[0].mxu0
  %v483 = vadd.f32 %v94, %v482
  %v484 = vpop.f32.mrb[0].mxu0
  %485 = vmatprep.mubr.bf16.mxu0 0
  %486 = vmatmul.mubr.bf16.gmra.mrb[0].mxu0 %v303
  %v487 = vpop.f32.mrb[0].mxu0
  %v488 = vadd.f32 %v94, %v487
  %v489 = vpop.f32.mrb[0].mxu0
  %v490 = vpop.f32.mrb[0].mxu0
  %v491 = vadd.f32 %v94, %v490
  %v492 = vpop.f32.mrb[0].mxu0
  %493 = vmatprep.mubr.bf16.mxu0 0
  %494 = vmatmul.mubr.bf16.gmra.mrb[0].mxu0 %v306
  %v495 = vpop.f32.mrb[0].mxu0
  %v496 = vadd.f32 %v94, %v495
  %v497 = vpop.f32.mrb[0].mxu0
  %v498 = vpop.f32.mrb[0].mxu0
  %v499 = vadd.f32 %v94, %v498
  %v500 = vpop.f32.mrb[0].mxu0
  %501 = vmatprep.mubr.bf16.mxu0 0
  %502 = vmatmul.mubr.bf16.gmra.mrb[0].mxu0 %v309
  %v503 = vpop.f32.mrb[0].mxu0
  %v504 = vadd.f32 %v94, %v503
  %v505 = vpop.f32.mrb[0].mxu0
  %v506 = vpop.f32.mrb[0].mxu0
  %v507 = vadd.f32 %v94, %v506
  %v508 = vpop.f32.mrb[0].mxu0
  %509 = vmatprep.mubr.bf16.mxu0 0
  %510 = vmatmul.mubr.bf16.gmra.mrb[0].mxu0 %v312
  %v511 = vpop.f32.mrb[0].mxu0
  %v512 = vadd.f32 %v94, %v511
  %v513 = vpop.f32.mrb[0].mxu0
  %v514 = vpop.f32.mrb[0].mxu0
  %v515 = vadd.f32 %v94, %v514
  %v516 = vpop.f32.mrb[0].mxu0
  %517 = vmatprep.mubr.bf16.mxu0 0
  %518 = vmatmul.mubr.bf16.gmra.mrb[0].mxu0 %v315
  %v519 = vpop.f32.mrb[0].mxu0
  %v520 = vadd.f32 %v94, %v519
  %v521 = vpop.f32.mrb[0].mxu0
  %v522 = vpop.f32.mrb[0].mxu0
  %v523 = vadd.f32 %v94, %v522
  %v524 = vpop.f32.mrb[0].mxu0
  %525 = vmatprep.mubr.bf16.mxu0 0
  %526 = vmatmul.mubr.bf16.gmra.mrb[0].mxu0 %v318
  %v527 = vpop.f32.mrb[0].mxu0
  %v528 = vadd.f32 %v94, %v527
  %v529 = vpop.f32.mrb[0].mxu0
  %v530 = vpop.f32.mrb[0].mxu0
  %v531 = vadd.f32 %v94, %v530
  %v532 = vpop.f32.mrb[0].mxu0
  %533 = vmatprep.mubr.bf16.mxu0 0
  %534 = vmatmul.mubr.bf16.gmra.mrb[0].mxu0 %v321
  %v535 = vpop.f32.mrb[0].mxu0
  %v536 = vadd.f32 %v94, %v535
  %v537 = vpop.f32.mrb[0].mxu0
  %v538 = vpop.f32.mrb[0].mxu0
  %v539 = vadd.f32 %v94, %v538
  %v540 = vpop.f32.mrb[0].mxu0
  %541 = vmatprep.mubr.bf16.mxu0 0
  %542 = vmatmul.mubr.bf16.gmra.mrb[0].mxu0 %v324
  %v543 = vpop.f32.mrb[0].mxu0
  %v544 = vadd.f32 %v94, %v543
  %v545 = vpop.f32.mrb[0].mxu0
  %v546 = vpop.f32.mrb[0].mxu0
  %v547 = vadd.f32 %v94, %v546
  %v548 = vpop.f32.mrb[0].mxu0
  %549 = vmatprep.mubr.bf16.mxu0 0
  %550 = vmatmul.mubr.bf16.gmra.mrb[0].mxu0 %v327
  %v551 = vpop.f32.mrb[0].mxu0
  %v552 = vadd.f32 %v94, %v551
  %v553 = vpop.f32.mrb[0].mxu0
  %v554 = vpop.f32.mrb[0].mxu0
  %v555 = vadd.f32 %v94, %v554
  %v556 = vpop.f32.mrb[0].mxu0
  %557 = vmatprep.mubr.bf16.mxu0 0
  %558 = vmatmul.mubr.bf16.gmra.mrb[0].mxu0 %v330
  %v559 = vpop.f32.mrb[0].mxu0
  %v560 = vadd.f32 %v94, %v559
  %v561 = vpop.f32.mrb[0].mxu0
  %v562 = vpop.f32.mrb[0].mxu0
  %v563 = vadd.f32 %v94, %v562
  %v564 = vpop.f32.mrb[0].mxu0
  %565 = vmatprep.mubr.bf16.mxu0 0
  %566 = vmatmul.mubr.bf16.gmra.mrb[0].mxu0 %v333
  %v567 = vpop.f32.mrb[0].mxu0
  %v568 = vadd.f32 %v94, %v567
  %v569 = vpop.f32.mrb[0].mxu0
  %v570 = vpop.f32.mrb[0].mxu0
  %v571 = vadd.f32 %v94, %v570
  %v572 = vpop.f32.mrb[0].mxu0
  %573 = vmatprep.mubr.bf16.mxu0 0
  %574 = vmatmul.mubr.bf16.gmra.mrb[0].mxu0 %v336
  %v575 = vpop.f32.mrb[0].mxu0
  %v576 = vadd.f32 %v94, %v575
  %v577 = vpop.f32.mrb[0].mxu0
  %v578 = vpop.f32.mrb[0].mxu0
  %v579 = vadd.f32 %v94, %v578
  %v580 = vpop.f32.mrb[0].mxu0
  %581 = vmatprep.mubr.bf16.mxu0 0
  %582 = vmatmul.mubr.bf16.gmra.mrb[0].mxu0 %v339
  %v583 = vpop.f32.mrb[0].mxu0
  %v584 = vadd.f32 %v94, %v583
  %v585 = vpop.f32.mrb[0].mxu0
  %v586 = vpop.f32.mrb[0].mxu0
  %v587 = vadd.f32 %v94, %v586
  %v588 = vpop.f32.mrb[0].mxu0
  %589 = vmatprep.mubr.bf16.mxu0 0
  %590 = vmatmul.mubr.bf16.gmra.mrb[0].mxu0 %v342
  %v591 = vpop.f32.mrb[0].mxu0
  %v592 = vadd.f32 %v94, %v591
  %v593 = vpop.f32.mrb[0].mxu0
  %v594 = vpop.f32.mrb[0].mxu0
  %v595 = vadd.f32 %v94, %v594
  %v596 = vpop.f32.mrb[0].mxu0
  %597 = vmatprep.mubr.bf16.mxu0 0
  %598 = vmatmul.mubr.bf16.gmra.mrb[0].mxu0 %v345
  %v599 = vpop.f32.mrb[0].mxu0
  %v600 = vadd.f32 %v94, %v599
  %v601 = vpop.f32.mrb[0].mxu0
  %v602 = vpop.f32.mrb[0].mxu0
  %v603 = vadd.f32 %v94, %v602
  %v604 = vpop.f32.mrb[0].mxu0
  %605 = vmatprep.mubr.bf16.mxu0 0
  %606 = vmatmul.mubr.bf16.gmra.mrb[0].mxu0 %v348
  %v607 = vpop.f32.mrb[0].mxu0
  %v608 = vadd.f32 %v94, %v607
  %v609 = vpop.f32.mrb[0].mxu0
  %v610 = vpop.f32.mrb[0].mxu0
  %v611 = vadd.f32 %v94, %v610
  %v612 = vpop.f32.mrb[0].mxu0
  %613 = vmatprep.mubr.bf16.mxu0 0
  %614 = vmatmul.mubr.bf16.gmra.mrb[0].mxu0 %v351
  %v615 = vpop.f32.mrb[0].mxu0
  %v616 = vadd.f32 %v94, %v615
  %v617 = vpop.f32.mrb[0].mxu0
  %v618 = vpop.f32.mrb[0].mxu0
  %v619 = vadd.f32 %v94, %v618
  %v620 = vpop.f32.mrb[0].mxu0
  %621 = vmatprep.mubr.bf16.mxu0 0
  %622 = vmatmul.mubr.bf16.gmra.mrb[0].mxu0 %v354
  %v623 = vpop.f32.mrb[0].mxu0
  %v624 = vadd.f32 %v94, %v623
  %v625 = vpop.f32.mrb[0].mxu0
  %v626 = vpop.f32.mrb[0].mxu0
  %v627 = vadd.f32 %v94, %v626
  %v628 = vpop.f32.mrb[0].mxu0
  %629 = vmatprep.mubr.bf16.mxu0 0
  %630 = vmatmul.mubr.bf16.gmra.mrb[0].mxu0 %v357
  %v631 = vpop.f32.mrb[0].mxu0
  %v632 = vadd.f32 %v94, %v631
  %v633 = vpop.f32.mrb[0].mxu0
  %v634 = vpop.f32.mrb[0].mxu0
  %v635 = vadd.f32 %v94, %v634
  %v636 = vpop.f32.mrb[0].mxu0
  %637 = vmatprep.mubr.bf16.mxu0 0
  %638 = vmatmul.mubr.bf16.gmra.mrb[0].mxu0 %v360
  %v639 = vpop.f32.mrb[0].mxu0
  %v640 = vadd.f32 %v94, %v639
  %v641 = vpop.f32.mrb[0].mxu0
  %v642 = vpop.f32.mrb[0].mxu0
  %v643 = vadd.f32 %v94, %v642
  %v644 = vpop.f32.mrb[0].mxu0
  %645 = vmatprep.mubr.bf16.mxu0 0
  %646 = vmatmul.mubr.bf16.gmra.mrb[0].mxu0 %v363
  %v647 = vpop.f32.mrb[0].mxu0
  %v648 = vadd.f32 %v94, %v647
  %v649 = vpop.f32.mrb[0].mxu0
  %v650 = vpop.f32.mrb[0].mxu0
  %v651 = vadd.f32 %v94, %v650
  %v652 = vpop.f32.mrb[0].mxu0
  %653 = vdwg.mxu0
  %v654 = vxor.u32 %v400, 2147483648
  %v655 = vxor.u32 %v403, 2147483648
  %v656 = vxor.u32 %v408, 2147483648
  %v657 = vxor.u32 %v411, 2147483648
  %v658 = vxor.u32 %v416, 2147483648
  %v659 = vxor.u32 %v419, 2147483648
  %v660 = vxor.u32 %v424, 2147483648
  %v661 = vxor.u32 %v427, 2147483648
  %v662 = vxor.u32 %v432, 2147483648
  %v663 = vxor.u32 %v435, 2147483648
  %v664 = vxor.u32 %v440, 2147483648
  %v665 = vxor.u32 %v443, 2147483648
  %v666 = vxor.u32 %v448, 2147483648
  %v667 = vxor.u32 %v451, 2147483648
  %v668 = vxor.u32 %v456, 2147483648
  %v669 = vxor.u32 %v459, 2147483648
  %v670 = vxor.u32 %v464, 2147483648
  %v671 = vxor.u32 %v467, 2147483648
  %v672 = vxor.u32 %v472, 2147483648
  %v673 = vxor.u32 %v475, 2147483648
  %v674 = vxor.u32 %v480, 2147483648
  %v675 = vxor.u32 %v483, 2147483648
  %v676 = vxor.u32 %v488, 2147483648
  %v677 = vxor.u32 %v491, 2147483648
  %v678 = vxor.u32 %v496, 2147483648
  %v679 = vxor.u32 %v499, 2147483648
  %v680 = vxor.u32 %v504, 2147483648
  %v681 = vxor.u32 %v507, 2147483648
  %v682 = vxor.u32 %v512, 2147483648
  %v683 = vxor.u32 %v515, 2147483648
  %v684 = vxor.u32 %v520, 2147483648
  %v685 = vxor.u32 %v523, 2147483648
  %v686 = vxor.u32 %v528, 2147483648
  %v687 = vxor.u32 %v531, 2147483648
  %v688 = vxor.u32 %v536, 2147483648
  %v689 = vxor.u32 %v539, 2147483648
  %v690 = vxor.u32 %v544, 2147483648
  %v691 = vxor.u32 %v547, 2147483648
  %v692 = vxor.u32 %v552, 2147483648
  %v693 = vxor.u32 %v555, 2147483648
  %v694 = vxor.u32 %v560, 2147483648
  %v695 = vxor.u32 %v563, 2147483648
  %v696 = vxor.u32 %v568, 2147483648
  %v697 = vxor.u32 %v571, 2147483648
  %v698 = vxor.u32 %v576, 2147483648
  %v699 = vxor.u32 %v579, 2147483648
  %v700 = vxor.u32 %v584, 2147483648
  %v701 = vxor.u32 %v587, 2147483648
  %v702 = vxor.u32 %v592, 2147483648
  %v703 = vxor.u32 %v595, 2147483648
  %v704 = vxor.u32 %v600, 2147483648
  %v705 = vxor.u32 %v603, 2147483648
  %v706 = vxor.u32 %v608, 2147483648
  %v707 = vxor.u32 %v611, 2147483648
  %v708 = vxor.u32 %v616, 2147483648
  %v709 = vxor.u32 %v619, 2147483648
  %v710 = vxor.u32 %v624, 2147483648
  %v711 = vxor.u32 %v627, 2147483648
  %v712 = vxor.u32 %v632, 2147483648
  %v713 = vxor.u32 %v635, 2147483648
  %v714 = vxor.u32 %v640, 2147483648
  %v715 = vxor.u32 %v643, 2147483648
  %v716 = vxor.u32 %v648, 2147483648
  %v717 = vxor.u32 %v651, 2147483648
  %v718 = vmul.f32 %v654, 1.442695
  %v719 = vpow.pop %v718
  %v720 = vmul.f32 %v655, 1.442695
  %v721 = vpow.pop %v720
  %v722 = vmul.f32 %v656, 1.442695
  %v723 = vpow.pop %v722
  %v724 = vmul.f32 %v657, 1.442695
  %v725 = vpow.pop %v724
  %v726 = vmul.f32 %v658, 1.442695
  %v727 = vpow.pop %v726
  %v728 = vmul.f32 %v659, 1.442695
  %v729 = vpow.pop %v728
  %v730 = vmul.f32 %v660, 1.442695
  %v731 = vpow.pop %v730
  %v732 = vmul.f32 %v661, 1.442695
  %v733 = vpow.pop %v732
  %v734 = vmul.f32 %v662, 1.442695
  %v735 = vpow.pop %v734
  %v736 = vmul.f32 %v663, 1.442695
  %v737 = vpow.pop %v736
  %v738 = vmul.f32 %v664, 1.442695
  %v739 = vpow.pop %v738
  %v740 = vmul.f32 %v665, 1.442695
  %v741 = vpow.pop %v740
  %v742 = vmul.f32 %v666, 1.442695
  %v743 = vpow.pop %v742
  %v744 = vmul.f32 %v667, 1.442695
  %v745 = vpow.pop %v744
  %v746 = vmul.f32 %v668, 1.442695
  %v747 = vpow.pop %v746
  %v748 = vmul.f32 %v669, 1.442695
  %v749 = vpow.pop %v748
  %v750 = vmul.f32 %v670, 1.442695
  %v751 = vpow.pop %v750
  %v752 = vmul.f32 %v671, 1.442695
  %v753 = vpow.pop %v752
  %v754 = vmul.f32 %v672, 1.442695
  %v755 = vpow.pop %v754
  %v756 = vmul.f32 %v673, 1.442695
  %v757 = vpow.pop %v756
  %v758 = vmul.f32 %v674, 1.442695
  %v759 = vpow.pop %v758
  %v760 = vmul.f32 %v675, 1.442695
  %v761 = vpow.pop %v760
  %v762 = vmul.f32 %v676, 1.442695
  %v763 = vpow.pop %v762
  %v764 = vmul.f32 %v677, 1.442695
  %v765 = vpow.pop %v764
  %v766 = vmul.f32 %v678, 1.442695
  %v767 = vpow.pop %v766
  %v768 = vmul.f32 %v679, 1.442695
  %v769 = vpow.pop %v768
  %v770 = vmul.f32 %v680, 1.442695
  %v771 = vpow.pop %v770
  %v772 = vmul.f32 %v681, 1.442695
  %v773 = vpow.pop %v772
  %v774 = vmul.f32 %v682, 1.442695
  %v775 = vpow.pop %v774
  %v776 = vmul.f32 %v683, 1.442695
  %v777 = vpow.pop %v776
  %v778 = vmul.f32 %v684, 1.442695
  %v779 = vpow.pop %v778
  %v780 = vmul.f32 %v685, 1.442695
  %v781 = vpow.pop %v780
  %v782 = vmul.f32 %v686, 1.442695
  %v783 = vpow.pop %v782
  %v784 = vmul.f32 %v687, 1.442695
  %v785 = vpow.pop %v784
  %v786 = vmul.f32 %v688, 1.442695
  %v787 = vpow.pop %v786
  %v788 = vmul.f32 %v689, 1.442695
  %v789 = vpow.pop %v788
  %v790 = vmul.f32 %v690, 1.442695
  %v791 = vpow.pop %v790
  %v792 = vmul.f32 %v691, 1.442695
  %v793 = vpow.pop %v792
  %v794 = vmul.f32 %v692, 1.442695
  %v795 = vpow.pop %v794
  %v796 = vmul.f32 %v693, 1.442695
  %v797 = vpow.pop %v796
  %v798 = vmul.f32 %v694, 1.442695
  %v799 = vpow.pop %v798
  %v800 = vmul.f32 %v695, 1.442695
  %v801 = vpow.pop %v800
  %v802 = vmul.f32 %v696, 1.442695
  %v803 = vpow.pop %v802
  %v804 = vmul.f32 %v697, 1.442695
  %v805 = vpow.pop %v804
  %v806 = vmul.f32 %v698, 1.442695
  %v807 = vpow.pop %v806
  %v808 = vmul.f32 %v699, 1.442695
  %v809 = vpow.pop %v808
  %v810 = vmul.f32 %v700, 1.442695
  %v811 = vpow.pop %v810
  %v812 = vmul.f32 %v701, 1.442695
  %v813 = vpow.pop %v812
  %v814 = vmul.f32 %v702, 1.442695
  %v815 = vpow.pop %v814
  %v816 = vmul.f32 %v703, 1.442695
  %v817 = vpow.pop %v816
  %v818 = vmul.f32 %v704, 1.442695
  %v819 = vpow.pop %v818
  %v820 = vmul.f32 %v705, 1.442695
  %v821 = vpow.pop %v820
  %v822 = vmul.f32 %v706, 1.442695
  %v823 = vpow.pop %v822
  %v824 = vmul.f32 %v707, 1.442695
  %v825 = vpow.pop %v824
  %v826 = vmul.f32 %v708, 1.442695
  %v827 = vpow.pop %v826
  %v828 = vmul.f32 %v709, 1.442695
  %v829 = vpow.pop %v828
  %v830 = vmul.f32 %v710, 1.442695
  %v831 = vpow.pop %v830
  %v832 = vmul.f32 %v711, 1.442695
  %v833 = vpow.pop %v832
  %v834 = vmul.f32 %v712, 1.442695
  %v835 = vpow.pop %v834
  %v836 = vmul.f32 %v713, 1.442695
  %v837 = vpow.pop %v836
  %v838 = vmul.f32 %v714, 1.442695
  %v839 = vpow.pop %v838
  %v840 = vmul.f32 %v715, 1.442695
  %v841 = vpow.pop %v840
  %v842 = vmul.f32 %v716, 1.442695
  %v843 = vpow.pop %v842
  %v844 = vmul.f32 %v717, 1.442695
  %v845 = vpow.pop %v844
  %v846 = vadd.f32 %v719, 1.0
  %v847 = vadd.f32 %v721, 1.0
  %v848 = vadd.f32 %v723, 1.0
  %v849 = vadd.f32 %v725, 1.0
  %v850 = vadd.f32 %v727, 1.0
  %v851 = vadd.f32 %v729, 1.0
  %v852 = vadd.f32 %v731, 1.0
  %v853 = vadd.f32 %v733, 1.0
  %v854 = vadd.f32 %v735, 1.0
  %v855 = vadd.f32 %v737, 1.0
  %v856 = vadd.f32 %v739, 1.0
  %v857 = vadd.f32 %v741, 1.0
  %v858 = vadd.f32 %v743, 1.0
  %v859 = vadd.f32 %v745, 1.0
  %v860 = vadd.f32 %v747, 1.0
  %v861 = vadd.f32 %v749, 1.0
  %v862 = vadd.f32 %v751, 1.0
  %v863 = vadd.f32 %v753, 1.0
  %v864 = vadd.f32 %v755, 1.0
  %v865 = vadd.f32 %v757, 1.0
  %v866 = vadd.f32 %v759, 1.0
  %v867 = vadd.f32 %v761, 1.0
  %v868 = vadd.f32 %v763, 1.0
  %v869 = vadd.f32 %v765, 1.0
  %v870 = vadd.f32 %v767, 1.0
  %v871 = vadd.f32 %v769, 1.0
  %v872 = vadd.f32 %v771, 1.0
  %v873 = vadd.f32 %v773, 1.0
  %v874 = vadd.f32 %v775, 1.0
  %v875 = vadd.f32 %v777, 1.0
  %v876 = vadd.f32 %v779, 1.0
  %v877 = vadd.f32 %v781, 1.0
  %v878 = vadd.f32 %v783, 1.0
  %v879 = vadd.f32 %v785, 1.0
  %v880 = vadd.f32 %v787, 1.0
  %v881 = vadd.f32 %v789, 1.0
  %v882 = vadd.f32 %v791, 1.0
  %v883 = vadd.f32 %v793, 1.0
  %v884 = vadd.f32 %v795, 1.0
  %v885 = vadd.f32 %v797, 1.0
  %v886 = vadd.f32 %v799, 1.0
  %v887 = vadd.f32 %v801, 1.0
  %v888 = vadd.f32 %v803, 1.0
  %v889 = vadd.f32 %v805, 1.0
  %v890 = vadd.f32 %v807, 1.0
  %v891 = vadd.f32 %v809, 1.0
  %v892 = vadd.f32 %v811, 1.0
  %v893 = vadd.f32 %v813, 1.0
  %v894 = vadd.f32 %v815, 1.0
  %v895 = vadd.f32 %v817, 1.0
  %v896 = vadd.f32 %v819, 1.0
  %v897 = vadd.f32 %v821, 1.0
  %v898 = vadd.f32 %v823, 1.0
  %v899 = vadd.f32 %v825, 1.0
  %v900 = vadd.f32 %v827, 1.0
  %v901 = vadd.f32 %v829, 1.0
  %v902 = vadd.f32 %v831, 1.0
  %v903 = vadd.f32 %v833, 1.0
  %v904 = vadd.f32 %v835, 1.0
  %v905 = vadd.f32 %v837, 1.0
  %v906 = vadd.f32 %v839, 1.0
  %v907 = vadd.f32 %v841, 1.0
  %v908 = vadd.f32 %v843, 1.0
  %v909 = vadd.f32 %v845, 1.0
  %v910 = vrcp.pop %v846
  %v911 = vmul.f32 1.0, %v910
  %v912 = vrcp.pop %v847
  %v913 = vmul.f32 1.0, %v912
  %v914 = vrcp.pop %v848
  %v915 = vmul.f32 1.0, %v914
  %v916 = vrcp.pop %v849
  %v917 = vmul.f32 1.0, %v916
  %v918 = vrcp.pop %v850
  %v919 = vmul.f32 1.0, %v918
  %v920 = vrcp.pop %v851
  %v921 = vmul.f32 1.0, %v920
  %v922 = vrcp.pop %v852
  %v923 = vmul.f32 1.0, %v922
  %v924 = vrcp.pop %v853
  %v925 = vmul.f32 1.0, %v924
  %v926 = vrcp.pop %v854
  %v927 = vmul.f32 1.0, %v926
  %v928 = vrcp.pop %v855
  %v929 = vmul.f32 1.0, %v928
  %v930 = vrcp.pop %v856
  %v931 = vmul.f32 1.0, %v930
  %v932 = vrcp.pop %v857
  %v933 = vmul.f32 1.0, %v932
  %v934 = vrcp.pop %v858
  %v935 = vmul.f32 1.0, %v934
  %v936 = vrcp.pop %v859
  %v937 = vmul.f32 1.0, %v936
  %v938 = vrcp.pop %v860
  %v939 = vmul.f32 1.0, %v938
  %v940 = vrcp.pop %v861
  %v941 = vmul.f32 1.0, %v940
  %v942 = vrcp.pop %v862
  %v943 = vmul.f32 1.0, %v942
  %v944 = vrcp.pop %v863
  %v945 = vmul.f32 1.0, %v944
  %v946 = vrcp.pop %v864
  %v947 = vmul.f32 1.0, %v946
  %v948 = vrcp.pop %v865
  %v949 = vmul.f32 1.0, %v948
  %v950 = vrcp.pop %v866
  %v951 = vmul.f32 1.0, %v950
  %v952 = vrcp.pop %v867
  %v953 = vmul.f32 1.0, %v952
  %v954 = vrcp.pop %v868
  %v955 = vmul.f32 1.0, %v954
  %v956 = vrcp.pop %v869
  %v957 = vmul.f32 1.0, %v956
  %v958 = vrcp.pop %v870
  %v959 = vmul.f32 1.0, %v958
  %v960 = vrcp.pop %v871
  %v961 = vmul.f32 1.0, %v960
  %v962 = vrcp.pop %v872
  %v963 = vmul.f32 1.0, %v962
  %v964 = vrcp.pop %v873
  %v965 = vmul.f32 1.0, %v964
  %v966 = vrcp.pop %v874
  %v967 = vmul.f32 1.0, %v966
  %v968 = vrcp.pop %v875
  %v969 = vmul.f32 1.0, %v968
  %v970 = vrcp.pop %v876
  %v971 = vmul.f32 1.0, %v970
  %v972 = vrcp.pop %v877
  %v973 = vmul.f32 1.0, %v972
  %v974 = vrcp.pop %v878
  %v975 = vmul.f32 1.0, %v974
  %v976 = vrcp.pop %v879
  %v977 = vmul.f32 1.0, %v976
  %v978 = vrcp.pop %v880
  %v979 = vmul.f32 1.0, %v978
  %v980 = vrcp.pop %v881
  %v981 = vmul.f32 1.0, %v980
  %v982 = vrcp.pop %v882
  %v983 = vmul.f32 1.0, %v982
  %v984 = vrcp.pop %v883
  %v985 = vmul.f32 1.0, %v984
  %v986 = vrcp.pop %v884
  %v987 = vmul.f32 1.0, %v986
  %v988 = vrcp.pop %v885
  %v989 = vmul.f32 1.0, %v988
  %v990 = vrcp.pop %v886
  %v991 = vmul.f32 1.0, %v990
  %v992 = vrcp.pop %v887
  %v993 = vmul.f32 1.0, %v992
  %v994 = vrcp.pop %v888
  %v995 = vmul.f32 1.0, %v994
  %v996 = vrcp.pop %v889
  %v997 = vmul.f32 1.0, %v996
  %v998 = vrcp.pop %v890
  %v999 = vmul.f32 1.0, %v998
  %v1000 = vrcp.pop %v891
  %v1001 = vmul.f32 1.0, %v1000
  %v1002 = vrcp.pop %v892
  %v1003 = vmul.f32 1.0, %v1002
  %v1004 = vrcp.pop %v893
  %v1005 = vmul.f32 1.0, %v1004
  %v1006 = vrcp.pop %v894
  %v1007 = vmul.f32 1.0, %v1006
  %v1008 = vrcp.pop %v895
  %v1009 = vmul.f32 1.0, %v1008
  %v1010 = vrcp.pop %v896
  %v1011 = vmul.f32 1.0, %v1010
  %v1012 = vrcp.pop %v897
  %v1013 = vmul.f32 1.0, %v1012
  %v1014 = vrcp.pop %v898
  %v1015 = vmul.f32 1.0, %v1014
  %v1016 = vrcp.pop %v899
  %v1017 = vmul.f32 1.0, %v1016
  %v1018 = vrcp.pop %v900
  %v1019 = vmul.f32 1.0, %v1018
  %v1020 = vrcp.pop %v901
  %v1021 = vmul.f32 1.0, %v1020
  %v1022 = vrcp.pop %v902
  %v1023 = vmul.f32 1.0, %v1022
  %v1024 = vrcp.pop %v903
  %v1025 = vmul.f32 1.0, %v1024
  %v1026 = vrcp.pop %v904
  %v1027 = vmul.f32 1.0, %v1026
  %v1028 = vrcp.pop %v905
  %v1029 = vmul.f32 1.0, %v1028
  %v1030 = vrcp.pop %v906
  %v1031 = vmul.f32 1.0, %v1030
  %v1032 = vrcp.pop %v907
  %v1033 = vmul.f32 1.0, %v1032
  %v1034 = vrcp.pop %v908
  %v1035 = vmul.f32 1.0, %v1034
  %v1036 = vrcp.pop %v909
  %v1037 = vmul.f32 1.0, %v1036
  %v1038 = vmul.f32 %v400, %v911
  %v1039 = vmul.f32 %v403, %v913
  %v1040 = vmul.f32 %v408, %v915
  %v1041 = vmul.f32 %v411, %v917
  %v1042 = vmul.f32 %v416, %v919
  %v1043 = vmul.f32 %v419, %v921
  %v1044 = vmul.f32 %v424, %v923
  %v1045 = vmul.f32 %v427, %v925
  %v1046 = vmul.f32 %v432, %v927
  %v1047 = vmul.f32 %v435, %v929
  %v1048 = vmul.f32 %v440, %v931
  %v1049 = vmul.f32 %v443, %v933
  %v1050 = vmul.f32 %v448, %v935
  %v1051 = vmul.f32 %v451, %v937
  %v1052 = vmul.f32 %v456, %v939
  %v1053 = vmul.f32 %v459, %v941
  %v1054 = vmul.f32 %v464, %v943
  %v1055 = vmul.f32 %v467, %v945
  %v1056 = vmul.f32 %v472, %v947
  %v1057 = vmul.f32 %v475, %v949
  %v1058 = vmul.f32 %v480, %v951
  %v1059 = vmul.f32 %v483, %v953
  %v1060 = vmul.f32 %v488, %v955
  %v1061 = vmul.f32 %v491, %v957
  %v1062 = vmul.f32 %v496, %v959
  %v1063 = vmul.f32 %v499, %v961
  %v1064 = vmul.f32 %v504, %v963
  %v1065 = vmul.f32 %v507, %v965
  %v1066 = vmul.f32 %v512, %v967
  %v1067 = vmul.f32 %v515, %v969
  %v1068 = vmul.f32 %v520, %v971
  %v1069 = vmul.f32 %v523, %v973
  %v1070 = vmul.f32 %v528, %v975
  %v1071 = vmul.f32 %v531, %v977
  %v1072 = vmul.f32 %v536, %v979
  %v1073 = vmul.f32 %v539, %v981
  %v1074 = vmul.f32 %v544, %v983
  %v1075 = vmul.f32 %v547, %v985
  %v1076 = vmul.f32 %v552, %v987
  %v1077 = vmul.f32 %v555, %v989
  %v1078 = vmul.f32 %v560, %v991
  %v1079 = vmul.f32 %v563, %v993
  %v1080 = vmul.f32 %v568, %v995
  %v1081 = vmul.f32 %v571, %v997
  %v1082 = vmul.f32 %v576, %v999
  %v1083 = vmul.f32 %v579, %v1001
  %v1084 = vmul.f32 %v584, %v1003
  %v1085 = vmul.f32 %v587, %v1005
  %v1086 = vmul.f32 %v592, %v1007
  %v1087 = vmul.f32 %v595, %v1009
  %v1088 = vmul.f32 %v600, %v1011
  %v1089 = vmul.f32 %v603, %v1013
  %v1090 = vmul.f32 %v608, %v1015
  %v1091 = vmul.f32 %v611, %v1017
  %v1092 = vmul.f32 %v616, %v1019
  %v1093 = vmul.f32 %v619, %v1021
  %v1094 = vmul.f32 %v624, %v1023
  %v1095 = vmul.f32 %v627, %v1025
  %v1096 = vmul.f32 %v632, %v1027
  %v1097 = vmul.f32 %v635, %v1029
  %v1098 = vmul.f32 %v640, %v1031
  %v1099 = vmul.f32 %v643, %v1033
  %v1100 = vmul.f32 %v648, %v1035
  %v1101 = vmul.f32 %v651, %v1037
  %v1102 = vadd.f32 %v1038, %v1039
  %v1103 = vadd.f32 %v1102, %v1040
  %v1104 = vadd.f32 %v1103, %v1041
  %v1105 = vadd.f32 %v1104, %v1042
  %v1106 = vadd.f32 %v1105, %v1043
  %v1107 = vadd.f32 %v1106, %v1044
  %v1108 = vadd.f32 %v1107, %v1045
  %v1109 = vrot.slane %v1108, 4
  %v1110 = vadd.f32 %v1108, %v1109
  %v1111 = vrot.slane %v1110, 2
  %v1112 = vadd.f32 %v1110, %v1111
  %v1113 = vrot.slane %v1112, 1
  %v1114 = vadd.f32 %v1112, %v1113
  %v1115 = vadd.f32 %v1046, %v1047
  %v1116 = vadd.f32 %v1115, %v1048
  %v1117 = vadd.f32 %v1116, %v1049
  %v1118 = vadd.f32 %v1117, %v1050
  %v1119 = vadd.f32 %v1118, %v1051
  %v1120 = vadd.f32 %v1119, %v1052
  %v1121 = vadd.f32 %v1120, %v1053
  %v1122 = vrot.slane %v1121, 4
  %v1123 = vadd.f32 %v1121, %v1122
  %v1124 = vrot.slane %v1123, 2
  %v1125 = vadd.f32 %v1123, %v1124
  %v1126 = vrot.slane %v1125, 1
  %v1127 = vadd.f32 %v1125, %v1126
  %v1128 = vadd.f32 %v1054, %v1055
  %v1129 = vadd.f32 %v1128, %v1056
  %v1130 = vadd.f32 %v1129, %v1057
  %v1131 = vadd.f32 %v1130, %v1058
  %v1132 = vadd.f32 %v1131, %v1059
  %v1133 = vadd.f32 %v1132, %v1060
  %v1134 = vadd.f32 %v1133, %v1061
  %v1135 = vrot.slane %v1134, 4
  %v1136 = vadd.f32 %v1134, %v1135
  %v1137 = vrot.slane %v1136, 2
  %v1138 = vadd.f32 %v1136, %v1137
  %v1139 = vrot.slane %v1138, 1
  %v1140 = vadd.f32 %v1138, %v1139
  %v1141 = vadd.f32 %v1062, %v1063
  %v1142 = vadd.f32 %v1141, %v1064
  %v1143 = vadd.f32 %v1142, %v1065
  %v1144 = vadd.f32 %v1143, %v1066
  %v1145 = vadd.f32 %v1144, %v1067
  %v1146 = vadd.f32 %v1145, %v1068
  %v1147 = vadd.f32 %v1146, %v1069
  %v1148 = vrot.slane %v1147, 4
  %v1149 = vadd.f32 %v1147, %v1148
  %v1150 = vrot.slane %v1149, 2
  %v1151 = vadd.f32 %v1149, %v1150
  %v1152 = vrot.slane %v1151, 1
  %v1153 = vadd.f32 %v1151, %v1152
  %v1154 = vadd.f32 %v1070, %v1071
  %v1155 = vadd.f32 %v1154, %v1072
  %v1156 = vadd.f32 %v1155, %v1073
  %v1157 = vadd.f32 %v1156, %v1074
  %v1158 = vadd.f32 %v1157, %v1075
  %v1159 = vadd.f32 %v1158, %v1076
  %v1160 = vadd.f32 %v1159, %v1077
  %v1161 = vrot.slane %v1160, 4
  %v1162 = vadd.f32 %v1160, %v1161
  %v1163 = vrot.slane %v1162, 2
  %v1164 = vadd.f32 %v1162, %v1163
  %v1165 = vrot.slane %v1164, 1
  %v1166 = vadd.f32 %v1164, %v1165
  %v1167 = vadd.f32 %v1078, %v1079
  %v1168 = vadd.f32 %v1167, %v1080
  %v1169 = vadd.f32 %v1168, %v1081
  %v1170 = vadd.f32 %v1169, %v1082
  %v1171 = vadd.f32 %v1170, %v1083
  %v1172 = vadd.f32 %v1171, %v1084
  %v1173 = vadd.f32 %v1172, %v1085
  %v1174 = vrot.slane %v1173, 4
  %v1175 = vadd.f32 %v1173, %v1174
  %v1176 = vrot.slane %v1175, 2
  %v1177 = vadd.f32 %v1175, %v1176
  %v1178 = vrot.slane %v1177, 1
  %v1179 = vadd.f32 %v1177, %v1178
  %v1180 = vadd.f32 %v1086, %v1087
  %v1181 = vadd.f32 %v1180, %v1088
  %v1182 = vadd.f32 %v1181, %v1089
  %v1183 = vadd.f32 %v1182, %v1090
  %v1184 = vadd.f32 %v1183, %v1091
  %v1185 = vadd.f32 %v1184, %v1092
  %v1186 = vadd.f32 %v1185, %v1093
  %v1187 = vrot.slane %v1186, 4
  %v1188 = vadd.f32 %v1186, %v1187
  %v1189 = vrot.slane %v1188, 2
  %v1190 = vadd.f32 %v1188, %v1189
  %v1191 = vrot.slane %v1190, 1
  %v1192 = vadd.f32 %v1190, %v1191
  %v1193 = vadd.f32 %v1094, %v1095
  %v1194 = vadd.f32 %v1193, %v1096
  %v1195 = vadd.f32 %v1194, %v1097
  %v1196 = vadd.f32 %v1195, %v1098
  %v1197 = vadd.f32 %v1196, %v1099
  %v1198 = vadd.f32 %v1197, %v1100
  %v1199 = vadd.f32 %v1198, %v1101
  %v1200 = vrot.slane %v1199, 4
  %v1201 = vadd.f32 %v1199, %v1200
  %v1202 = vrot.slane %v1201, 2
  %v1203 = vadd.f32 %v1201, %v1202
  %v1204 = vrot.slane %v1203, 1
  %v1205 = vadd.f32 %v1203, %v1204
  %v1206 = vmul.f32 %v1114, 0.015625
  %v1207 = vmul.f32 %v1127, 0.015625
  %v1208 = vmul.f32 %v1140, 0.015625
  %v1209 = vmul.f32 %v1153, 0.015625
  %v1210 = vmul.f32 %v1166, 0.015625
  %v1211 = vmul.f32 %v1179, 0.015625
  %v1212 = vmul.f32 %v1192, 0.015625
  %v1213 = vmul.f32 %v1205, 0.015625
  %v1214 = vpack.c.bf16 %v1206, %v1206
  %v1215 = vpack.c.bf16 %v1207, %v1207
  %v1216 = vpack.c.bf16 %v1208, %v1208
  %v1217 = vpack.c.bf16 %v1209, %v1209
  %v1218 = vpack.c.bf16 %v1210, %v1210
  %v1219 = vpack.c.bf16 %v1211, %v1211
  %v1220 = vpack.c.bf16 %v1212, %v1212
  %v1221 = vpack.c.bf16 %v1213, %v1213
  %v1222 = vld [vmem:[%s3] sm:$0xff]
  %v1223 = vld [vmem:[%s3 + $0x8] sm:$0xff]
  %v1224 = vld [vmem:[%s3 + $0x10] sm:$0xff]
  %v1225 = vld [vmem:[%s3 + $0x18] sm:$0xff]
  %v1226 = vld [vmem:[%s3 + $0x20] sm:$0xff]
  %v1227 = vld [vmem:[%s3 + $0x28] sm:$0xff]
  %v1228 = vld [vmem:[%s3 + $0x30] sm:$0xff]
  %v1229 = vld [vmem:[%s3 + $0x38] sm:$0xff]
  %v1230 = vld [vmem:[%s3 + $0x40] sm:$0xff]
  %v1231 = vld [vmem:[%s3 + $0x48] sm:$0xff]
  %v1232 = vld [vmem:[%s3 + $0x50] sm:$0xff]
  %v1233 = vld [vmem:[%s3 + $0x58] sm:$0xff]
  %v1234 = vld [vmem:[%s3 + $0x60] sm:$0xff]
  %v1235 = vld [vmem:[%s3 + $0x68] sm:$0xff]
  %v1236 = vld [vmem:[%s3 + $0x70] sm:$0xff]
  %v1237 = vld [vmem:[%s3 + $0x78] sm:$0xff]
  %v1238 = vld [vmem:[%s3 + $0x80] sm:$0xff]
  %v1239 = vld [vmem:[%s3 + $0x88] sm:$0xff]
  %v1240 = vld [vmem:[%s3 + $0x90] sm:$0xff]
  %v1241 = vld [vmem:[%s3 + $0x98] sm:$0xff]
  %v1242 = vld [vmem:[%s3 + $0xa0] sm:$0xff]
  %v1243 = vld [vmem:[%s3 + $0xa8] sm:$0xff]
  %v1244 = vld [vmem:[%s3 + $0xb0] sm:$0xff]
  %v1245 = vld [vmem:[%s3 + $0xb8] sm:$0xff]
  %v1246 = vld [vmem:[%s3 + $0xc0] sm:$0xff]
  %v1247 = vld [vmem:[%s3 + $0xc8] sm:$0xff]
  %v1248 = vld [vmem:[%s3 + $0xd0] sm:$0xff]
  %v1249 = vld [vmem:[%s3 + $0xd8] sm:$0xff]
  %v1250 = vld [vmem:[%s3 + $0xe0] sm:$0xff]
  %v1251 = vld [vmem:[%s3 + $0xe8] sm:$0xff]
  %v1252 = vld [vmem:[%s3 + $0xf0] sm:$0xff]
  %v1253 = vld [vmem:[%s3 + $0xf8] sm:$0xff]
  %v1254 = vld [vmem:[%s4] sm:$0xf]
  %v1256 = vlaneseq
  %v1257 = vshrl.u32 %v1256, 7
  %v1258 = vsub.s32 0, %v1257
  %v1259 = vrot.slane %v1254, %v1258
  %v1260 = vlaneseq
  %v1261 = vshrl.u32 %v1260, 7
  %v1262 = vsub.s32 1, %v1261
  %v1263 = vrot.slane %v1254, %v1262
  %v1264 = vlaneseq
  %v1265 = vshrl.u32 %v1264, 7
  %v1266 = vsub.s32 2, %v1265
  %v1267 = vrot.slane %v1254, %v1266
  %v1268 = vlaneseq
  %v1269 = vshrl.u32 %v1268, 7
  %v1270 = vsub.s32 3, %v1269
  %v1271 = vrot.slane %v1254, %v1270
  %v1284 = vunpack.c.l.b16 %v1214
  %v1285 = vunpack.c.l.b16 %v1215
  %v1286 = vunpack.c.l.b16 %v1216
  %v1287 = vunpack.c.l.b16 %v1217
  %v1288 = vunpack.c.l.b16 %v1218
  %v1289 = vunpack.c.l.b16 %v1219
  %v1290 = vunpack.c.l.b16 %v1220
  %v1291 = vunpack.c.l.b16 %v1221
  %vm1292 = vcmask 1041409
  %v1293 = vsel %vm1292, %v1285, %v1284
  %vm1294 = vcmask 1042434
  %v1295 = vsel %vm1294, %v1286, %v1293
  %vm1296 = vcmask 1043459
  %v1297 = vsel %vm1296, %v1287, %v1295
  %vm1298 = vcmask 1044484
  %v1299 = vsel %vm1298, %v1288, %v1297
  %vm1300 = vcmask 1045509
  %v1301 = vsel %vm1300, %v1289, %v1299
  %vm1302 = vcmask 1046534
  %v1303 = vsel %vm1302, %v1290, %v1301
  %vm1304 = vcmask 1047559
  %v1305 = vsel %vm1304, %v1291, %v1303
  %v1306 = vpack.c.b16 %v1305, %v1305
  %v1340 = vunpack.c.l.b16 %v1222
  %v1341 = vunpack.c.h.b16 %v1222
  %v1342 = vunpack.c.l.b16 %v1223
  %v1343 = vunpack.c.h.b16 %v1223
  %v1344 = vunpack.c.l.b16 %v1224
  %v1345 = vunpack.c.h.b16 %v1224
  %v1346 = vunpack.c.l.b16 %v1225
  %v1347 = vunpack.c.h.b16 %v1225
  %v1348 = vunpack.c.l.b16 %v1226
  %v1349 = vunpack.c.h.b16 %v1226
  %v1350 = vunpack.c.l.b16 %v1227
  %v1351 = vunpack.c.h.b16 %v1227
  %v1352 = vunpack.c.l.b16 %v1228
  %v1353 = vunpack.c.h.b16 %v1228
  %v1354 = vunpack.c.l.b16 %v1229
  %v1355 = vunpack.c.h.b16 %v1229
  %v1356 = vunpack.c.l.b16 %v1230
  %v1357 = vunpack.c.h.b16 %v1230
  %v1358 = vunpack.c.l.b16 %v1231
  %v1359 = vunpack.c.h.b16 %v1231
  %v1360 = vunpack.c.l.b16 %v1232
  %v1361 = vunpack.c.h.b16 %v1232
  %v1362 = vunpack.c.l.b16 %v1233
  %v1363 = vunpack.c.h.b16 %v1233
  %v1364 = vunpack.c.l.b16 %v1234
  %v1365 = vunpack.c.h.b16 %v1234
  %v1366 = vunpack.c.l.b16 %v1235
  %v1367 = vunpack.c.h.b16 %v1235
  %v1368 = vunpack.c.l.b16 %v1236
  %v1369 = vunpack.c.h.b16 %v1236
  %v1370 = vunpack.c.l.b16 %v1237
  %v1371 = vunpack.c.h.b16 %v1237
  %v1372 = vunpack.c.l.b16 %v1238
  %v1373 = vunpack.c.h.b16 %v1238
  %v1374 = vunpack.c.l.b16 %v1239
  %v1375 = vunpack.c.h.b16 %v1239
  %v1376 = vunpack.c.l.b16 %v1240
  %v1377 = vunpack.c.h.b16 %v1240
  %v1378 = vunpack.c.l.b16 %v1241
  %v1379 = vunpack.c.h.b16 %v1241
  %v1380 = vunpack.c.l.b16 %v1242
  %v1381 = vunpack.c.h.b16 %v1242
  %v1382 = vunpack.c.l.b16 %v1243
  %v1383 = vunpack.c.h.b16 %v1243
  %v1384 = vunpack.c.l.b16 %v1244
  %v1385 = vunpack.c.h.b16 %v1244
  %v1386 = vunpack.c.l.b16 %v1245
  %v1387 = vunpack.c.h.b16 %v1245
  %v1388 = vunpack.c.l.b16 %v1246
  %v1389 = vunpack.c.h.b16 %v1246
  %v1390 = vunpack.c.l.b16 %v1247
  %v1391 = vunpack.c.h.b16 %v1247
  %v1392 = vunpack.c.l.b16 %v1248
  %v1393 = vunpack.c.h.b16 %v1248
  %v1394 = vunpack.c.l.b16 %v1249
  %v1395 = vunpack.c.h.b16 %v1249
  %v1396 = vunpack.c.l.b16 %v1250
  %v1397 = vunpack.c.h.b16 %v1250
  %v1398 = vunpack.c.l.b16 %v1251
  %v1399 = vunpack.c.h.b16 %v1251
  %v1400 = vunpack.c.l.b16 %v1252
  %v1401 = vunpack.c.h.b16 %v1252
  %v1402 = vunpack.c.l.b16 %v1253
  %v1403 = vunpack.c.h.b16 %v1253
  %v1404 = vpack.c.b16 %v1344, %v1340
  %v1405 = vpack.c.b16 %v1345, %v1341
  %v1406 = vpack.c.b16 %v1346, %v1342
  %v1407 = vpack.c.b16 %v1347, %v1343
  %v1408 = vpack.c.b16 %v1352, %v1348
  %v1409 = vpack.c.b16 %v1353, %v1349
  %v1410 = vpack.c.b16 %v1354, %v1350
  %v1411 = vpack.c.b16 %v1355, %v1351
  %v1412 = vpack.c.b16 %v1360, %v1356
  %v1413 = vpack.c.b16 %v1361, %v1357
  %v1414 = vpack.c.b16 %v1362, %v1358
  %v1415 = vpack.c.b16 %v1363, %v1359
  %v1416 = vpack.c.b16 %v1368, %v1364
  %v1417 = vpack.c.b16 %v1369, %v1365
  %v1418 = vpack.c.b16 %v1370, %v1366
  %v1419 = vpack.c.b16 %v1371, %v1367
  %v1420 = vpack.c.b16 %v1376, %v1372
  %v1421 = vpack.c.b16 %v1377, %v1373
  %v1422 = vpack.c.b16 %v1378, %v1374
  %v1423 = vpack.c.b16 %v1379, %v1375
  %v1424 = vpack.c.b16 %v1384, %v1380
  %v1425 = vpack.c.b16 %v1385, %v1381
  %v1426 = vpack.c.b16 %v1386, %v1382
  %v1427 = vpack.c.b16 %v1387, %v1383
  %v1428 = vpack.c.b16 %v1392, %v1388
  %v1429 = vpack.c.b16 %v1393, %v1389
  %v1430 = vpack.c.b16 %v1394, %v1390
  %v1431 = vpack.c.b16 %v1395, %v1391
  %v1432 = vpack.c.b16 %v1400, %v1396
  %v1433 = vpack.c.b16 %v1401, %v1397
  %v1434 = vpack.c.b16 %v1402, %v1398
  %v1435 = vpack.c.b16 %v1403, %v1399
  %1468 = vmatprep.subr.bf16.mxu0 %v1405
  %1469 = vmatpush1.bf16.msra.mxu0 %v1404
  %1470 = vmatprep.subr.bf16.mxu0 %v1409
  %1471 = vmatpush1.bf16.msra.mxu0 %v1408
  %1472 = vmatprep.subr.bf16.mxu0 %v1413
  %1473 = vmatpush1.bf16.msra.mxu0 %v1412
  %1474 = vmatprep.subr.bf16.mxu0 %v1417
  %1475 = vmatpush1.bf16.msra.mxu0 %v1416
  %1476 = vmatprep.subr.bf16.mxu0 %v1421
  %1477 = vmatpush1.bf16.msra.mxu0 %v1420
  %1478 = vmatprep.subr.bf16.mxu0 %v1425
  %1479 = vmatpush1.bf16.msra.mxu0 %v1424
  %1480 = vmatprep.subr.bf16.mxu0 %v1429
  %1481 = vmatpush1.bf16.msra.mxu0 %v1428
  %1482 = vmatprep.subr.bf16.mxu0 %v1433
  %1483 = vmatpush1.bf16.msra.mxu0 %v1432
  %1484 = vmatprep.subr.bf16.mxu0 0
  %1485 = vmatpush1.bf16.msra.mxu0 0
  %1486 = vmatprep.subr.bf16.mxu0 0
  %1487 = vmatpush1.bf16.msra.mxu0 0
  %1488 = vmatprep.subr.bf16.mxu0 0
  %1489 = vmatpush1.bf16.msra.mxu0 0
  %1490 = vmatprep.subr.bf16.mxu0 0
  %1491 = vmatpush1.bf16.msra.mxu0 0
  %1492 = vmatprep.subr.bf16.mxu0 0
  %1493 = vmatpush1.bf16.msra.mxu0 0
  %1494 = vmatprep.subr.bf16.mxu0 0
  %1495 = vmatpush1.bf16.msra.mxu0 0
  %1496 = vmatprep.subr.bf16.mxu0 0
  %1497 = vmatpush1.bf16.msra.mxu0 0
  %1498 = vmatprep.subr.bf16.mxu0 0
  %1499 = vmatpush1.bf16.msra.mxu0 0
  %1500 = vmatprep.mubr.bf16.mxu0 0
  %1501 = vmatmul.mubr.bf16.gmra.mrb[0].mxu0 %v1306
  %v1502 = vpop.f32.mrb[0].mxu0
  %v1503 = vadd.f32 %v1259, %v1502
  %v1504 = vpop.f32.mrb[0].mxu0
  %v1505 = vadd.f32 %v1263, %v1504
  %v1506 = vpop.f32.mrb[0].mxu0
  %v1507 = vpop.f32.mrb[0].mxu0
  %1508 = vdwg.mxu0
  %1509 = vmatprep.subr.bf16.mxu0 %v1407
  %1510 = vmatpush1.bf16.msra.mxu0 %v1406
  %1511 = vmatprep.subr.bf16.mxu0 %v1411
  %1512 = vmatpush1.bf16.msra.mxu0 %v1410
  %1513 = vmatprep.subr.bf16.mxu0 %v1415
  %1514 = vmatpush1.bf16.msra.mxu0 %v1414
  %1515 = vmatprep.subr.bf16.mxu0 %v1419
  %1516 = vmatpush1.bf16.msra.mxu0 %v1418
  %1517 = vmatprep.subr.bf16.mxu0 %v1423
  %1518 = vmatpush1.bf16.msra.mxu0 %v1422
  %1519 = vmatprep.subr.bf16.mxu0 %v1427
  %1520 = vmatpush1.bf16.msra.mxu0 %v1426
  %1521 = vmatprep.subr.bf16.mxu0 %v1431
  %1522 = vmatpush1.bf16.msra.mxu0 %v1430
  %1523 = vmatprep.subr.bf16.mxu0 %v1435
  %1524 = vmatpush1.bf16.msra.mxu0 %v1434
  %1525 = vmatprep.subr.bf16.mxu0 0
  %1526 = vmatpush1.bf16.msra.mxu0 0
  %1527 = vmatprep.subr.bf16.mxu0 0
  %1528 = vmatpush1.bf16.msra.mxu0 0
  %1529 = vmatprep.subr.bf16.mxu0 0
  %1530 = vmatpush1.bf16.msra.mxu0 0
  %1531 = vmatprep.subr.bf16.mxu0 0
  %1532 = vmatpush1.bf16.msra.mxu0 0
  %1533 = vmatprep.subr.bf16.mxu0 0
  %1534 = vmatpush1.bf16.msra.mxu0 0
  %1535 = vmatprep.subr.bf16.mxu0 0
  %1536 = vmatpush1.bf16.msra.mxu0 0
  %1537 = vmatprep.subr.bf16.mxu0 0
  %1538 = vmatpush1.bf16.msra.mxu0 0
  %1539 = vmatprep.subr.bf16.mxu0 0
  %1540 = vmatpush1.bf16.msra.mxu0 0
  %1541 = vmatprep.mubr.bf16.mxu0 0
  %1542 = vmatmul.mubr.bf16.gmra.mrb[0].mxu0 %v1306
  %v1543 = vpop.f32.mrb[0].mxu0
  %v1544 = vadd.f32 %v1267, %v1543
  %v1545 = vpop.f32.mrb[0].mxu0
  %v1546 = vadd.f32 %v1271, %v1545
  %v1547 = vpop.f32.mrb[0].mxu0
  %v1548 = vpop.f32.mrb[0].mxu0
  %1549 = vdwg.mxu0
  %1550 = vst [vmem:[%s5] sm:$0xff] %v1503
  %1551 = vst [vmem:[%s5 + $0x8] sm:$0xff] %v1505
  %1552 = vst [vmem:[%s5 + $0x10] sm:$0xff] %v1544
  %1553 = vst [vmem:[%s5 + $0x18] sm:$0xff] %v1546
  // Predicated region
  $region22: #{face_classifier_forward.2} parent=0 // pred_check
    _
  $region23: #{face_classifier_forward.2} parent=0 // pred_check_branch
    %1555 = sbr.rel (0) target = $region25
  $region24: #{face_classifier_forward.2} parent=0 // pred_region
    _
  $region25: #{face_classifier_forward.2} parent=0 // pred_fallthru
    _
  // Predicated region
  $region26: #{face_classifier_forward.2} parent=0 // pred_check
    _
  $region27: #{face_classifier_forward.2} parent=0 // pred_check_branch
    %1557 = sbr.rel (0) target = $region29
  $region28: #{face_classifier_forward.2} parent=0 // pred_region
    _
  $region29: #{face_classifier_forward.2} parent=0 // pred_fallthru
    _

// kernel: face_classifier_forward.3
$region0: #{face_classifier_forward.3}
  #allocation0 [shape = 'u32[]', space=smem, size = 0x4, offset = 0x4, fixed_abs, tag = 'smem constant byte address 0x4 - core index']
  #allocation1 [shape = 'u32[144,128]{1,0:T(1,128)}', space=vmem, size = 0x12000, scoped, tag = 'internal scratch']
  %s0 = inlined_call_operand.vmem [shape: f32[4,2,512], index: 0, kind: input, shape index: {}]
  %s1 = inlined_call_operand.vmem [shape: bf16[128,512], index: 1, kind: input, shape index: {}]
  %s2 = inlined_call_operand.vmem [shape: f32[1,128], index: 2, kind: input, shape index: {}]
  %s3 = inlined_call_operand.vmem [shape: f32[1,128], index: 3, kind: input, shape index: {}]
  %s4 = inlined_call_operand.vmem [shape: f32[128,128], index: 4, kind: input, shape index: {}]
  %s5 = inlined_call_operand.vmem [shape: f32[1,128], index: 5, kind: input, shape index: {}]
  %s6 = inlined_call_operand.hbm [shape: f32[2,128], index: 6, kind: output, shape index: {}]
  %s7 = sld [smem:[#allocation0]]
  $region34: #{face_classifier_forward.3} parent=0
    _
  %s9 = ssub.s32 1, %s7
  %s10 = scalar_select 0, %s9, %s7
  $region1: #{face_classifier_forward.3} parent=0
    #allocation2 [shape = 'u8[1024]{0}', space=vmem, size = 0x400, scoped, tag = 'output window, operand 0, single buffered']
    #allocation3 [shape = 's32[1]{0}', space=sflag, size = 0x4, scoped, tag = 'scoped memory for face_classifier_forward.3']
    %11 = vsyncpa [#allocation3], 0
    // Predicated region
    $region2: #{face_classifier_forward.3} parent=1 // pred_check
      _
    $region3: #{face_classifier_forward.3} parent=1 // pred_check_branch
      %13 = sbr.rel (0) target = $region5
    $region4: #{face_classifier_forward.3} parent=1 // pred_region
      _
    $region5: #{face_classifier_forward.3} parent=1 // pred_fallthru
      _
    // Predicated region
    $region6: #{face_classifier_forward.3} parent=1 // pred_check
      _
    $region7: #{face_classifier_forward.3} parent=1 // pred_check_branch
      %15 = sbr.rel (0) target = $region9
    $region8: #{face_classifier_forward.3} parent=1 // pred_region
      _
    $region9: #{face_classifier_forward.3} parent=1 // pred_fallthru
      _
    // Predicated region
    $region10: #{face_classifier_forward.3} parent=1 // pred_check
      _
    $region11: #{face_classifier_forward.3} parent=1 // pred_check_branch
      %17 = sbr.rel (0) target = $region13
    $region12: #{face_classifier_forward.3} parent=1 // pred_region
      _
    $region13: #{face_classifier_forward.3} parent=1 // pred_fallthru
      _
    // Predicated region
    $region14: #{face_classifier_forward.3} parent=1 // pred_check
      _
    $region15: #{face_classifier_forward.3} parent=1 // pred_check_branch
      %19 = sbr.rel (0) target = $region17
    $region16: #{face_classifier_forward.3} parent=1 // pred_region
      _
    $region17: #{face_classifier_forward.3} parent=1 // pred_fallthru
      _
    // Predicated region
    $region18: #{face_classifier_forward.3} parent=1 // pred_check
      _
    $region19: #{face_classifier_forward.3} parent=1 // pred_check_branch
      %21 = sbr.rel (0) target = $region21
    $region20: #{face_classifier_forward.3} parent=1 // pred_region
      _
    $region21: #{face_classifier_forward.3} parent=1 // pred_fallthru
      _
    // Predicated region
    $region22: #{face_classifier_forward.3} parent=1 // pred_check
      _
    $region23: #{face_classifier_forward.3} parent=1 // pred_check_branch
      %23 = sbr.rel (0) target = $region25
    $region24: #{face_classifier_forward.3} parent=1 // pred_region
      _
    $region25: #{face_classifier_forward.3} parent=1 // pred_fallthru
      _
    %v25 = vld [vmem:[%s1] sm:$0xff]
    %v26 = vld [vmem:[%s1 + $0x8] sm:$0xff]
    %v27 = vld [vmem:[%s1 + $0x10] sm:$0xff]
    %v28 = vld [vmem:[%s1 + $0x18] sm:$0xff]
    %v29 = vld [vmem:[%s1 + $0x20] sm:$0xff]
    %v30 = vld [vmem:[%s1 + $0x28] sm:$0xff]
    %v31 = vld [vmem:[%s1 + $0x30] sm:$0xff]
    %v32 = vld [vmem:[%s1 + $0x38] sm:$0xff]
    %v33 = vld [vmem:[%s1 + $0x40] sm:$0xff]
    %v34 = vld [vmem:[%s1 + $0x48] sm:$0xff]
    %v35 = vld [vmem:[%s1 + $0x50] sm:$0xff]
    %v36 = vld [vmem:[%s1 + $0x58] sm:$0xff]
    %v37 = vld [vmem:[%s1 + $0x60] sm:$0xff]
    %v38 = vld [vmem:[%s1 + $0x68] sm:$0xff]
    %v39 = vld [vmem:[%s1 + $0x70] sm:$0xff]
    %v40 = vld [vmem:[%s1 + $0x78] sm:$0xff]
    %v41 = vld [vmem:[%s1 + $0x80] sm:$0xff]
    %v42 = vld [vmem:[%s1 + $0x88] sm:$0xff]
    %v43 = vld [vmem:[%s1 + $0x90] sm:$0xff]
    %v44 = vld [vmem:[%s1 + $0x98] sm:$0xff]
    %v45 = vld [vmem:[%s1 + $0xa0] sm:$0xff]
    %v46 = vld [vmem:[%s1 + $0xa8] sm:$0xff]
    %v47 = vld [vmem:[%s1 + $0xb0] sm:$0xff]
    %v48 = vld [vmem:[%s1 + $0xb8] sm:$0xff]
    %v49 = vld [vmem:[%s1 + $0xc0] sm:$0xff]
    %v50 = vld [vmem:[%s1 + $0xc8] sm:$0xff]
    %v51 = vld [vmem:[%s1 + $0xd0] sm:$0xff]
    %v52 = vld [vmem:[%s1 + $0xd8] sm:$0xff]
    %v53 = vld [vmem:[%s1 + $0xe0] sm:$0xff]
    %v54 = vld [vmem:[%s1 + $0xe8] sm:$0xff]
    %v55 = vld [vmem:[%s1 + $0xf0] sm:$0xff]
    %v56 = vld [vmem:[%s1 + $0xf8] sm:$0xff]
    %v57 = vld [vmem:[%s0] sm:$0xff]
    %v90 = vunpack.c.l.b16 %v25
    %v91 = vunpack.c.h.b16 %v25
    %v92 = vunpack.c.l.b16 %v26
    %v93 = vunpack.c.h.b16 %v26
    %v94 = vunpack.c.l.b16 %v27
    %v95 = vunpack.c.h.b16 %v27
    %v96 = vunpack.c.l.b16 %v28
    %v97 = vunpack.c.h.b16 %v28
    %v98 = vunpack.c.l.b16 %v29
    %v99 = vunpack.c.h.b16 %v29
    %v100 = vunpack.c.l.b16 %v30
    %v101 = vunpack.c.h.b16 %v30
    %v102 = vunpack.c.l.b16 %v31
    %v103 = vunpack.c.h.b16 %v31
    %v104 = vunpack.c.l.b16 %v32
    %v105 = vunpack.c.h.b16 %v32
    %v106 = vunpack.c.l.b16 %v33
    %v107 = vunpack.c.h.b16 %v33
    %v108 = vunpack.c.l.b16 %v34
    %v109 = vunpack.c.h.b16 %v34
    %v110 = vunpack.c.l.b16 %v35
    %v111 = vunpack.c.h.b16 %v35
    %v112 = vunpack.c.l.b16 %v36
    %v113 = vunpack.c.h.b16 %v36
    %v114 = vunpack.c.l.b16 %v37
    %v115 = vunpack.c.h.b16 %v37
    %v116 = vunpack.c.l.b16 %v38
    %v117 = vunpack.c.h.b16 %v38
    %v118 = vunpack.c.l.b16 %v39
    %v119 = vunpack.c.h.b16 %v39
    %v120 = vunpack.c.l.b16 %v40
    %v121 = vunpack.c.h.b16 %v40
    %v122 = vunpack.c.l.b16 %v41
    %v123 = vunpack.c.h.b16 %v41
    %v124 = vunpack.c.l.b16 %v42
    %v125 = vunpack.c.h.b16 %v42
    %v126 = vunpack.c.l.b16 %v43
    %v127 = vunpack.c.h.b16 %v43
    %v128 = vunpack.c.l.b16 %v44
    %v129 = vunpack.c.h.b16 %v44
    %v130 = vunpack.c.l.b16 %v45
    %v131 = vunpack.c.h.b16 %v45
    %v132 = vunpack.c.l.b16 %v46
    %v133 = vunpack.c.h.b16 %v46
    %v134 = vunpack.c.l.b16 %v47
    %v135 = vunpack.c.h.b16 %v47
    %v136 = vunpack.c.l.b16 %v48
    %v137 = vunpack.c.h.b16 %v48
    %v138 = vunpack.c.l.b16 %v49
    %v139 = vunpack.c.h.b16 %v49
    %v140 = vunpack.c.l.b16 %v50
    %v141 = vunpack.c.h.b16 %v50
    %v142 = vunpack.c.l.b16 %v51
    %v143 = vunpack.c.h.b16 %v51
    %v144 = vunpack.c.l.b16 %v52
    %v145 = vunpack.c.h.b16 %v52
    %v146 = vunpack.c.l.b16 %v53
    %v147 = vunpack.c.h.b16 %v53
    %v148 = vunpack.c.l.b16 %v54
    %v149 = vunpack.c.h.b16 %v54
    %v150 = vunpack.c.l.b16 %v55
    %v151 = vunpack.c.h.b16 %v55
    %v152 = vunpack.c.l.b16 %v56
    %v153 = vunpack.c.h.b16 %v56
    %v154 = vpack.c.b16 %v94, %v90
    %v155 = vpack.c.b16 %v95, %v91
    %v156 = vpack.c.b16 %v96, %v92
    %v157 = vpack.c.b16 %v97, %v93
    %v158 = vpack.c.b16 %v102, %v98
    %v159 = vpack.c.b16 %v103, %v99
    %v160 = vpack.c.b16 %v104, %v100
    %v161 = vpack.c.b16 %v105, %v101
    %v162 = vpack.c.b16 %v110, %v106
    %v163 = vpack.c.b16 %v111, %v107
    %v164 = vpack.c.b16 %v112, %v108
    %v165 = vpack.c.b16 %v113, %v109
    %v166 = vpack.c.b16 %v118, %v114
    %v167 = vpack.c.b16 %v119, %v115
    %v168 = vpack.c.b16 %v120, %v116
    %v169 = vpack.c.b16 %v121, %v117
    %v170 = vpack.c.b16 %v126, %v122
    %v171 = vpack.c.b16 %v127, %v123
    %v172 = vpack.c.b16 %v128, %v124
    %v173 = vpack.c.b16 %v129, %v125
    %v174 = vpack.c.b16 %v134, %v130
    %v175 = vpack.c.b16 %v135, %v131
    %v176 = vpack.c.b16 %v136, %v132
    %v177 = vpack.c.b16 %v137, %v133
    %v178 = vpack.c.b16 %v142, %v138
    %v179 = vpack.c.b16 %v143, %v139
    %v180 = vpack.c.b16 %v144, %v140
    %v181 = vpack.c.b16 %v145, %v141
    %v182 = vpack.c.b16 %v150, %v146
    %v183 = vpack.c.b16 %v151, %v147
    %v184 = vpack.c.b16 %v152, %v148
    %v185 = vpack.c.b16 %v153, %v149
    %218 = vmatprep.subr.bf16.mxu0 %v155
    %219 = vmatpush1.bf16.msra.mxu0 %v154
    %220 = vmatprep.subr.bf16.mxu0 %v159
    %221 = vmatpush1.bf16.msra.mxu0 %v158
    %222 = vmatprep.subr.bf16.mxu0 %v163
    %223 = vmatpush1.bf16.msra.mxu0 %v162
    %224 = vmatprep.subr.bf16.mxu0 %v167
    %225 = vmatpush1.bf16.msra.mxu0 %v166
    %226 = vmatprep.subr.bf16.mxu0 %v171
    %227 = vmatpush1.bf16.msra.mxu0 %v170
    %228 = vmatprep.subr.bf16.mxu0 %v175
    %229 = vmatpush1.bf16.msra.mxu0 %v174
    %230 = vmatprep.subr.bf16.mxu0 %v179
    %231 = vmatpush1.bf16.msra.mxu0 %v178
    %232 = vmatprep.subr.bf16.mxu0 %v183
    %233 = vmatpush1.bf16.msra.mxu0 %v182
    %234 = vmatprep.subr.bf16.mxu0 0
    %235 = vmatpush1.bf16.msra.mxu0 0
    %236 = vmatprep.subr.bf16.mxu0 0
    %237 = vmatpush1.bf16.msra.mxu0 0
    %238 = vmatprep.subr.bf16.mxu0 0
    %239 = vmatpush1.bf16.msra.mxu0 0
    %240 = vmatprep.subr.bf16.mxu0 0
    %241 = vmatpush1.bf16.msra.mxu0 0
    %242 = vmatprep.subr.bf16.mxu0 0
    %243 = vmatpush1.bf16.msra.mxu0 0
    %244 = vmatprep.subr.bf16.mxu0 0
    %245 = vmatpush1.bf16.msra.mxu0 0
    %246 = vmatprep.subr.bf16.mxu0 0
    %247 = vmatpush1.bf16.msra.mxu0 0
    %248 = vmatprep.subr.bf16.mxu0 0
    %249 = vmatpush1.bf16.msra.mxu0 0
    %250 = vmatprep.mubr.bf16.mxu0 0
    %251 = vmatmul.mubr.bf16.gmra.mrb[0].mxu0 0
    %v252 = vpop.f32.mrb[0].mxu0
    %v253 = vadd.f32 0.0, %v252
    %v254 = vpop.f32.mrb[0].mxu0
    %v255 = vadd.f32 0.0, %v254
    %v256 = vpop.f32.mrb[0].mxu0
    %v257 = vpop.f32.mrb[0].mxu0
    %258 = vdwg.mxu0
    %259 = vmatprep.subr.bf16.mxu0 %v157
    %260 = vmatpush1.bf16.msra.mxu0 %v156
    %261 = vmatprep.subr.bf16.mxu0 %v161
    %262 = vmatpush1.bf16.msra.mxu0 %v160
    %263 = vmatprep.subr.bf16.mxu0 %v165
    %264 = vmatpush1.bf16.msra.mxu0 %v164
    %265 = vmatprep.subr.bf16.mxu0 %v169
    %266 = vmatpush1.bf16.msra.mxu0 %v168
    %267 = vmatprep.subr.bf16.mxu0 %v173
    %268 = vmatpush1.bf16.msra.mxu0 %v172
    %269 = vmatprep.subr.bf16.mxu0 %v177
    %270 = vmatpush1.bf16.msra.mxu0 %v176
    %271 = vmatprep.subr.bf16.mxu0 %v181
    %272 = vmatpush1.bf16.msra.mxu0 %v180
    %273 = vmatprep.subr.bf16.mxu0 %v185
    %274 = vmatpush1.bf16.msra.mxu0 %v184
    %275 = vmatprep.subr.bf16.mxu0 0
    %276 = vmatpush1.bf16.msra.mxu0 0
    %277 = vmatprep.subr.bf16.mxu0 0
    %278 = vmatpush1.bf16.msra.mxu0 0
    %279 = vmatprep.subr.bf16.mxu0 0
    %280 = vmatpush1.bf16.msra.mxu0 0
    %281 = vmatprep.subr.bf16.mxu0 0
    %282 = vmatpush1.bf16.msra.mxu0 0
    %283 = vmatprep.subr.bf16.mxu0 0
    %284 = vmatpush1.bf16.msra.mxu0 0
    %285 = vmatprep.subr.bf16.mxu0 0
    %286 = vmatpush1.bf16.msra.mxu0 0
    %287 = vmatprep.subr.bf16.mxu0 0
    %288 = vmatpush1.bf16.msra.mxu0 0
    %289 = vmatprep.subr.bf16.mxu0 0
    %290 = vmatpush1.bf16.msra.mxu0 0
    %291 = vmatprep.mubr.bf16.mxu0 0
    %292 = vmatmul.mubr.bf16.gmra.mrb[0].mxu0 0
    %v293 = vpop.f32.mrb[0].mxu0
    %v294 = vadd.f32 0.0, %v293
    %v295 = vpop.f32.mrb[0].mxu0
    %v296 = vadd.f32 0.0, %v295
    %v297 = vpop.f32.mrb[0].mxu0
    %v298 = vpop.f32.mrb[0].mxu0
    %299 = vdwg.mxu0
    %v304 = vcombine.low %v253, %v255
    %v305 = vcombine.low %v294, %v296
    %v307 = vunpack.c.l.s4 1983009808
    %v308 = vunpack.c.0.s8 %v307
    %v309 = vlaneseq
    %v310 = vshrl.u32 %v309, 7
    %v311 = vsub.s32 %v308, %v310
    %v312 = vrot.slane %v304, %v311
    %v314 = vunpack.c.l.s4 1983009808
    %v315 = vunpack.c.0.s8 %v314
    %v316 = vlaneseq
    %v317 = vshrl.u32 %v316, 7
    %v318 = vsub.s32 %v315, %v317
    %v319 = vrot.slane %v305, %v318
    %v320 = vcombine.low %v312, %v319
    %v322 = vadd.f32 %v57, %v320
    %v323 = vxor.u32 %v322, 2147483648
    %v324 = vmul.f32 %v323, 1.442695
    %v325 = vpow.pop %v324
    %v326 = vadd.f32 %v325, 1.0
    %v327 = vrcp.pop %v326
    %v328 = vmul.f32 1.0, %v327
    %v330 = vrot.slane %v322, 2
    %v332 = vxor.u32 %v330, 2147483648
    %v333 = vmul.f32 %v332, 1.442695
    %v334 = vpow.pop %v333
    %v335 = vadd.f32 %v334, 1.0
    %v336 = vrcp.pop %v335
    %v337 = vmul.f32 1.0, %v336
    %v338 = vrot.slane %v322, 4
    %v340 = vtanh.pop %v338
    %v341 = vrot.slane %v322, 6
    %v343 = vxor.u32 %v341, 2147483648
    %v344 = vmul.f32 %v343, 1.442695
    %v345 = vpow.pop %v344
    %v346 = vadd.f32 %v345, 1.0
    %v347 = vrcp.pop %v346
    %v348 = vmul.f32 1.0, %v347
    %v349 = vmul.f32 %v337, 0.0
    %v350 = vmul.f32 %v328, %v340
    %v351 = vadd.f32 %v349, %v350
    %v352 = vtanh.pop %v351
    %v353 = vmul.f32 %v348, %v352
    %v354 = vadd.f32 %v353, 0.0
    %s355 = scalar_lea.vmem %s0, 8
    %v356 = vld [vmem:[%s355] sm:$0xff]
    %v357 = vpack.c.bf16 %v353, %v353
    %358 = vmatprep.subr.bf16.mxu0 %v155
    %359 = vmatpush1.bf16.msra.mxu0 %v154
    %360 = vmatprep.subr.bf16.mxu0 %v159
    %361 = vmatpush1.bf16.msra.mxu0 %v158
    %362 = vmatprep.subr.bf16.mxu0 %v163
    %363 = vmatpush1.bf16.msra.mxu0 %v162
    %364 = vmatprep.subr.bf16.mxu0 %v167
    %365 = vmatpush1.bf16.msra.mxu0 %v166
    %366 = vmatprep.subr.bf16.mxu0 %v171
    %367 = vmatpush1.bf16.msra.mxu0 %v170
    %368 = vmatprep.subr.bf16.mxu0 %v175
    %369 = vmatpush1.bf16.msra.mxu0 %v174
    %370 = vmatprep.subr.bf16.mxu0 %v179
    %371 = vmatpush1.bf16.msra.mxu0 %v178
    %372 = vmatprep.subr.bf16.mxu0 %v183
    %373 = vmatpush1.bf16.msra.mxu0 %v182
    %374 = vmatprep.subr.bf16.mxu0 0
    %375 = vmatpush1.bf16.msra.mxu0 0
    %376 = vmatprep.subr.bf16.mxu0 0
    %377 = vmatpush1.bf16.msra.mxu0 0
    %378 = vmatprep.subr.bf16.mxu0 0
    %379 = vmatpush1.bf16.msra.mxu0 0
    %380 = vmatprep.subr.bf16.mxu0 0
    %381 = vmatpush1.bf16.msra.mxu0 0
    %382 = vmatprep.subr.bf16.mxu0 0
    %383 = vmatpush1.bf16.msra.mxu0 0
    %384 = vmatprep.subr.bf16.mxu0 0
    %385 = vmatpush1.bf16.msra.mxu0 0
    %386 = vmatprep.subr.bf16.mxu0 0
    %387 = vmatpush1.bf16.msra.mxu0 0
    %388 = vmatprep.subr.bf16.mxu0 0
    %389 = vmatpush1.bf16.msra.mxu0 0
    %390 = vmatprep.mubr.bf16.mxu0 0
    %391 = vmatmul.mubr.bf16.gmra.mrb[0].mxu0 %v357
    %v392 = vpop.f32.mrb[0].mxu0
    %v393 = vadd.f32 0.0, %v392
    %v394 = vpop.f32.mrb[0].mxu0
    %v395 = vadd.f32 0.0, %v394
    %v396 = vpop.f32.mrb[0].mxu0
    %v397 = vpop.f32.mrb[0].mxu0
    %398 = vdwg.mxu0
    %399 = vmatprep.subr.bf16.mxu0 %v157
    %400 = vmatpush1.bf16.msra.mxu0 %v156
    %401 = vmatprep.subr.bf16.mxu0 %v161
    %402 = vmatpush1.bf16.msra.mxu0 %v160
    %403 = vmatprep.subr.bf16.mxu0 %v165
    %404 = vmatpush1.bf16.msra.mxu0 %v164
    %405 = vmatprep.subr.bf16.mxu0 %v169
    %406 = vmatpush1.bf16.msra.mxu0 %v168
    %407 = vmatprep.subr.bf16.mxu0 %v173
    %408 = vmatpush1.bf16.msra.mxu0 %v172
    %409 = vmatprep.subr.bf16.mxu0 %v177
    %410 = vmatpush1.bf16.msra.mxu0 %v176
    %411 = vmatprep.subr.bf16.mxu0 %v181
    %412 = vmatpush1.bf16.msra.mxu0 %v180
    %413 = vmatprep.subr.bf16.mxu0 %v185
    %414 = vmatpush1.bf16.msra.mxu0 %v184
    %415 = vmatprep.subr.bf16.mxu0 0
    %416 = vmatpush1.bf16.msra.mxu0 0
    %417 = vmatprep.subr.bf16.mxu0 0
    %418 = vmatpush1.bf16.msra.mxu0 0
    %419 = vmatprep.subr.bf16.mxu0 0
    %420 = vmatpush1.bf16.msra.mxu0 0
    %421 = vmatprep.subr.bf16.mxu0 0
    %422 = vmatpush1.bf16.msra.mxu0 0
    %423 = vmatprep.subr.bf16.mxu0 0
    %424 = vmatpush1.bf16.msra.mxu0 0
    %425 = vmatprep.subr.bf16.mxu0 0
    %426 = vmatpush1.bf16.msra.mxu0 0
    %427 = vmatprep.subr.bf16.mxu0 0
    %428 = vmatpush1.bf16.msra.mxu0 0
    %429 = vmatprep.subr.bf16.mxu0 0
    %430 = vmatpush1.bf16.msra.mxu0 0
    %431 = vmatprep.mubr.bf16.mxu0 0
    %432 = vmatmul.mubr.bf16.gmra.mrb[0].mxu0 %v357
    %v433 = vpop.f32.mrb[0].mxu0
    %v434 = vadd.f32 0.0, %v433
    %v435 = vpop.f32.mrb[0].mxu0
    %v436 = vadd.f32 0.0, %v435
    %v437 = vpop.f32.mrb[0].mxu0
    %v438 = vpop.f32.mrb[0].mxu0
    %439 = vdwg.mxu0
    %v444 = vcombine.low %v393, %v395
    %v445 = vcombine.low %v434, %v436
    %v447 = vunpack.c.l.s4 1983009808
    %v448 = vunpack.c.0.s8 %v447
    %v449 = vlaneseq
    %v450 = vshrl.u32 %v449, 7
    %v451 = vsub.s32 %v448, %v450
    %v452 = vrot.slane %v444, %v451
    %v454 = vunpack.c.l.s4 1983009808
    %v455 = vunpack.c.0.s8 %v454
    %v456 = vlaneseq
    %v457 = vshrl.u32 %v456, 7
    %v458 = vsub.s32 %v455, %v457
    %v459 = vrot.slane %v445, %v458
    %v460 = vcombine.low %v452, %v459
    %v462 = vadd.f32 %v356, %v460
    %v463 = vxor.u32 %v462, 2147483648
    %v464 = vmul.f32 %v463, 1.442695
    %v465 = vpow.pop %v464
    %v466 = vadd.f32 %v465, 1.0
    %v467 = vrcp.pop %v466
    %v468 = vmul.f32 1.0, %v467
    %v470 = vrot.slane %v462, 2
    %v472 = vxor.u32 %v470, 2147483648
    %v473 = vmul.f32 %v472, 1.442695
    %v474 = vpow.pop %v473
    %v475 = vadd.f32 %v474, 1.0
    %v476 = vrcp.pop %v475
    %v477 = vmul.f32 1.0, %v476
    %v478 = vrot.slane %v462, 4
    %v480 = vtanh.pop %v478
    %v481 = vrot.slane %v462, 6
    %v483 = vxor.u32 %v481, 2147483648
    %v484 = vmul.f32 %v483, 1.442695
    %v485 = vpow.pop %v484
    %v486 = vadd.f32 %v485, 1.0
    %v487 = vrcp.pop %v486
    %v488 = vmul.f32 1.0, %v487
    %v489 = vmul.f32 %v477, %v351
    %v490 = vmul.f32 %v468, %v480
    %v491 = vadd.f32 %v489, %v490
    %v492 = vtanh.pop %v491
    %v493 = vmul.f32 %v488, %v492
    %v494 = vadd.f32 %v354, %v493
    %s495 = scalar_lea.vmem %s0, 16
    %v496 = vld [vmem:[%s495] sm:$0xff]
    %v497 = vpack.c.bf16 %v493, %v493
    %498 = vmatprep.subr.bf16.mxu0 %v155
    %499 = vmatpush1.bf16.msra.mxu0 %v154
    %500 = vmatprep.subr.bf16.mxu0 %v159
    %501 = vmatpush1.bf16.msra.mxu0 %v158
    %502 = vmatprep.subr.bf16.mxu0 %v163
    %503 = vmatpush1.bf16.msra.mxu0 %v162
    %504 = vmatprep.subr.bf16.mxu0 %v167
    %505 = vmatpush1.bf16.msra.mxu0 %v166
    %506 = vmatprep.subr.bf16.mxu0 %v171
    %507 = vmatpush1.bf16.msra.mxu0 %v170
    %508 = vmatprep.subr.bf16.mxu0 %v175
    %509 = vmatpush1.bf16.msra.mxu0 %v174
    %510 = vmatprep.subr.bf16.mxu0 %v179
    %511 = vmatpush1.bf16.msra.mxu0 %v178
    %512 = vmatprep.subr.bf16.mxu0 %v183
    %513 = vmatpush1.bf16.msra.mxu0 %v182
    %514 = vmatprep.subr.bf16.mxu0 0
    %515 = vmatpush1.bf16.msra.mxu0 0
    %516 = vmatprep.subr.bf16.mxu0 0
    %517 = vmatpush1.bf16.msra.mxu0 0
    %518 = vmatprep.subr.bf16.mxu0 0
    %519 = vmatpush1.bf16.msra.mxu0 0
    %520 = vmatprep.subr.bf16.mxu0 0
    %521 = vmatpush1.bf16.msra.mxu0 0
    %522 = vmatprep.subr.bf16.mxu0 0
    %523 = vmatpush1.bf16.msra.mxu0 0
    %524 = vmatprep.subr.bf16.mxu0 0
    %525 = vmatpush1.bf16.msra.mxu0 0
    %526 = vmatprep.subr.bf16.mxu0 0
    %527 = vmatpush1.bf16.msra.mxu0 0
    %528 = vmatprep.subr.bf16.mxu0 0
    %529 = vmatpush1.bf16.msra.mxu0 0
    %530 = vmatprep.mubr.bf16.mxu0 0
    %531 = vmatmul.mubr.bf16.gmra.mrb[0].mxu0 %v497
    %v532 = vpop.f32.mrb[0].mxu0
    %v533 = vadd.f32 0.0, %v532
    %v534 = vpop.f32.mrb[0].mxu0
    %v535 = vadd.f32 0.0, %v534
    %v536 = vpop.f32.mrb[0].mxu0
    %v537 = vpop.f32.mrb[0].mxu0
    %538 = vdwg.mxu0
    %539 = vmatprep.subr.bf16.mxu0 %v157
    %540 = vmatpush1.bf16.msra.mxu0 %v156
    %541 = vmatprep.subr.bf16.mxu0 %v161
    %542 = vmatpush1.bf16.msra.mxu0 %v160
    %543 = vmatprep.subr.bf16.mxu0 %v165
    %544 = vmatpush1.bf16.msra.mxu0 %v164
    %545 = vmatprep.subr.bf16.mxu0 %v169
    %546 = vmatpush1.bf16.msra.mxu0 %v168
    %547 = vmatprep.subr.bf16.mxu0 %v173
    %548 = vmatpush1.bf16.msra.mxu0 %v172
    %549 = vmatprep.subr.bf16.mxu0 %v177
    %550 = vmatpush1.bf16.msra.mxu0 %v176
    %551 = vmatprep.subr.bf16.mxu0 %v181
    %552 = vmatpush1.bf16.msra.mxu0 %v180
    %553 = vmatprep.subr.bf16.mxu0 %v185
    %554 = vmatpush1.bf16.msra.mxu0 %v184
    %555 = vmatprep.subr.bf16.mxu0 0
    %556 = vmatpush1.bf16.msra.mxu0 0
    %557 = vmatprep.subr.bf16.mxu0 0
    %558 = vmatpush1.bf16.msra.mxu0 0
    %559 = vmatprep.subr.bf16.mxu0 0
    %560 = vmatpush1.bf16.msra.mxu0 0
    %561 = vmatprep.subr.bf16.mxu0 0
    %562 = vmatpush1.bf16.msra.mxu0 0
    %563 = vmatprep.subr.bf16.mxu0 0
    %564 = vmatpush1.bf16.msra.mxu0 0
    %565 = vmatprep.subr.bf16.mxu0 0
    %566 = vmatpush1.bf16.msra.mxu0 0
    %567 = vmatprep.subr.bf16.mxu0 0
    %568 = vmatpush1.bf16.msra.mxu0 0
    %569 = vmatprep.subr.bf16.mxu0 0
    %570 = vmatpush1.bf16.msra.mxu0 0
    %571 = vmatprep.mubr.bf16.mxu0 0
    %572 = vmatmul.mubr.bf16.gmra.mrb[0].mxu0 %v497
    %v573 = vpop.f32.mrb[0].mxu0
    %v574 = vadd.f32 0.0, %v573
    %v575 = vpop.f32.mrb[0].mxu0
    %v576 = vadd.f32 0.0, %v575
    %v577 = vpop.f32.mrb[0].mxu0
    %v578 = vpop.f32.mrb[0].mxu0
    %579 = vdwg.mxu0
    %v584 = vcombine.low %v533, %v535
    %v585 = vcombine.low %v574, %v576
    %v587 = vunpack.c.l.s4 1983009808
    %v588 = vunpack.c.0.s8 %v587
    %v589 = vlaneseq
    %v590 = vshrl.u32 %v589, 7
    %v591 = vsub.s32 %v588, %v590
    %v592 = vrot.slane %v584, %v591
    %v594 = vunpack.c.l.s4 1983009808
    %v595 = vunpack.c.0.s8 %v594
    %v596 = vlaneseq
    %v597 = vshrl.u32 %v596, 7
    %v598 = vsub.s32 %v595, %v597
    %v599 = vrot.slane %v585, %v598
    %v600 = vcombine.low %v592, %v599
    %v602 = vadd.f32 %v496, %v600
    %v603 = vxor.u32 %v602, 2147483648
    %v604 = vmul.f32 %v603, 1.442695
    %v605 = vpow.pop %v604
    %v606 = vadd.f32 %v605, 1.0
    %v607 = vrcp.pop %v606
    %v608 = vmul.f32 1.0, %v607
    %v610 = vrot.slane %v602, 2
    %v612 = vxor.u32 %v610, 2147483648
    %v613 = vmul.f32 %v612, 1.442695
    %v614 = vpow.pop %v613
    %v615 = vadd.f32 %v614, 1.0
    %v616 = vrcp.pop %v615
    %v617 = vmul.f32 1.0, %v616
    %v618 = vrot.slane %v602, 4
    %v620 = vtanh.pop %v618
    %v621 = vrot.slane %v602, 6
    %v623 = vxor.u32 %v621, 2147483648
    %v624 = vmul.f32 %v623, 1.442695
    %v625 = vpow.pop %v624
    %v626 = vadd.f32 %v625, 1.0
    %v627 = vrcp.pop %v626
    %v628 = vmul.f32 1.0, %v627
    %v629 = vmul.f32 %v617, %v491
    %v630 = vmul.f32 %v608, %v620
    %v631 = vadd.f32 %v629, %v630
    %v632 = vtanh.pop %v631
    %v633 = vmul.f32 %v628, %v632
    %v634 = vadd.f32 %v494, %v633
    %s635 = scalar_lea.vmem %s0, 24
    %v636 = vld [vmem:[%s635] sm:$0xff]
    %v637 = vpack.c.bf16 %v633, %v633
    %638 = vmatprep.subr.bf16.mxu0 %v155
    %639 = vmatpush1.bf16.msra.mxu0 %v154
    %640 = vmatprep.subr.bf16.mxu0 %v159
    %641 = vmatpush1.bf16.msra.mxu0 %v158
    %642 = vmatprep.subr.bf16.mxu0 %v163
    %643 = vmatpush1.bf16.msra.mxu0 %v162
    %644 = vmatprep.subr.bf16.mxu0 %v167
    %645 = vmatpush1.bf16.msra.mxu0 %v166
    %646 = vmatprep.subr.bf16.mxu0 %v171
    %647 = vmatpush1.bf16.msra.mxu0 %v170
    %648 = vmatprep.subr.bf16.mxu0 %v175
    %649 = vmatpush1.bf16.msra.mxu0 %v174
    %650 = vmatprep.subr.bf16.mxu0 %v179
    %651 = vmatpush1.bf16.msra.mxu0 %v178
    %652 = vmatprep.subr.bf16.mxu0 %v183
    %653 = vmatpush1.bf16.msra.mxu0 %v182
    %654 = vmatprep.subr.bf16.mxu0 0
    %655 = vmatpush1.bf16.msra.mxu0 0
    %656 = vmatprep.subr.bf16.mxu0 0
    %657 = vmatpush1.bf16.msra.mxu0 0
    %658 = vmatprep.subr.bf16.mxu0 0
    %659 = vmatpush1.bf16.msra.mxu0 0
    %660 = vmatprep.subr.bf16.mxu0 0
    %661 = vmatpush1.bf16.msra.mxu0 0
    %662 = vmatprep.subr.bf16.mxu0 0
    %663 = vmatpush1.bf16.msra.mxu0 0
    %664 = vmatprep.subr.bf16.mxu0 0
    %665 = vmatpush1.bf16.msra.mxu0 0
    %666 = vmatprep.subr.bf16.mxu0 0
    %667 = vmatpush1.bf16.msra.mxu0 0
    %668 = vmatprep.subr.bf16.mxu0 0
    %669 = vmatpush1.bf16.msra.mxu0 0
    %670 = vmatprep.mubr.bf16.mxu0 0
    %671 = vmatmul.mubr.bf16.gmra.mrb[0].mxu0 %v637
    %v672 = vpop.f32.mrb[0].mxu0
    %v673 = vadd.f32 0.0, %v672
    %v674 = vpop.f32.mrb[0].mxu0
    %v675 = vadd.f32 0.0, %v674
    %v676 = vpop.f32.mrb[0].mxu0
    %v677 = vpop.f32.mrb[0].mxu0
    %678 = vdwg.mxu0
    %679 = vmatprep.subr.bf16.mxu0 %v157
    %680 = vmatpush1.bf16.msra.mxu0 %v156
    %681 = vmatprep.subr.bf16.mxu0 %v161
    %682 = vmatpush1.bf16.msra.mxu0 %v160
    %683 = vmatprep.subr.bf16.mxu0 %v165
    %684 = vmatpush1.bf16.msra.mxu0 %v164
    %685 = vmatprep.subr.bf16.mxu0 %v169
    %686 = vmatpush1.bf16.msra.mxu0 %v168
    %687 = vmatprep.subr.bf16.mxu0 %v173
    %688 = vmatpush1.bf16.msra.mxu0 %v172
    %689 = vmatprep.subr.bf16.mxu0 %v177
    %690 = vmatpush1.bf16.msra.mxu0 %v176
    %691 = vmatprep.subr.bf16.mxu0 %v181
    %692 = vmatpush1.bf16.msra.mxu0 %v180
    %693 = vmatprep.subr.bf16.mxu0 %v185
    %694 = vmatpush1.bf16.msra.mxu0 %v184
    %695 = vmatprep.subr.bf16.mxu0 0
    %696 = vmatpush1.bf16.msra.mxu0 0
    %697 = vmatprep.subr.bf16.mxu0 0
    %698 = vmatpush1.bf16.msra.mxu0 0
    %699 = vmatprep.subr.bf16.mxu0 0
    %700 = vmatpush1.bf16.msra.mxu0 0
    %701 = vmatprep.subr.bf16.mxu0 0
    %702 = vmatpush1.bf16.msra.mxu0 0
    %703 = vmatprep.subr.bf16.mxu0 0
    %704 = vmatpush1.bf16.msra.mxu0 0
    %705 = vmatprep.subr.bf16.mxu0 0
    %706 = vmatpush1.bf16.msra.mxu0 0
    %707 = vmatprep.subr.bf16.mxu0 0
    %708 = vmatpush1.bf16.msra.mxu0 0
    %709 = vmatprep.subr.bf16.mxu0 0
    %710 = vmatpush1.bf16.msra.mxu0 0
    %711 = vmatprep.mubr.bf16.mxu0 0
    %712 = vmatmul.mubr.bf16.gmra.mrb[0].mxu0 %v637
    %v713 = vpop.f32.mrb[0].mxu0
    %v714 = vadd.f32 0.0, %v713
    %v715 = vpop.f32.mrb[0].mxu0
    %v716 = vadd.f32 0.0, %v715
    %v717 = vpop.f32.mrb[0].mxu0
    %v718 = vpop.f32.mrb[0].mxu0
    %719 = vdwg.mxu0
    %v724 = vcombine.low %v673, %v675
    %v725 = vcombine.low %v714, %v716
    %v727 = vunpack.c.l.s4 1983009808
    %v728 = vunpack.c.0.s8 %v727
    %v729 = vlaneseq
    %v730 = vshrl.u32 %v729, 7
    %v731 = vsub.s32 %v728, %v730
    %v732 = vrot.slane %v724, %v731
    %v734 = vunpack.c.l.s4 1983009808
    %v735 = vunpack.c.0.s8 %v734
    %v736 = vlaneseq
    %v737 = vshrl.u32 %v736, 7
    %v738 = vsub.s32 %v735, %v737
    %v739 = vrot.slane %v725, %v738
    %v740 = vcombine.low %v732, %v739
    %v742 = vadd.f32 %v636, %v740
    %v743 = vxor.u32 %v742, 2147483648
    %v744 = vmul.f32 %v743, 1.442695
    %v745 = vpow.pop %v744
    %v746 = vadd.f32 %v745, 1.0
    %v747 = vrcp.pop %v746
    %v748 = vmul.f32 1.0, %v747
    %v750 = vrot.slane %v742, 2
    %v752 = vxor.u32 %v750, 2147483648
    %v753 = vmul.f32 %v752, 1.442695
    %v754 = vpow.pop %v753
    %v755 = vadd.f32 %v754, 1.0
    %v756 = vrcp.pop %v755
    %v757 = vmul.f32 1.0, %v756
    %v758 = vrot.slane %v742, 4
    %v760 = vtanh.pop %v758
    %v761 = vrot.slane %v742, 6
    %v763 = vxor.u32 %v761, 2147483648
    %v764 = vmul.f32 %v763, 1.442695
    %v765 = vpow.pop %v764
    %v766 = vadd.f32 %v765, 1.0
    %v767 = vrcp.pop %v766
    %v768 = vmul.f32 1.0, %v767
    %v769 = vmul.f32 %v757, %v631
    %v770 = vmul.f32 %v748, %v760
    %v771 = vadd.f32 %v769, %v770
    %v772 = vtanh.pop %v771
    %v773 = vmul.f32 %v768, %v772
    %v774 = vadd.f32 %v634, %v773
    %v775 = vmul.f32 %v774, 0.25
    %vm776 = vcmask 1041408
    %v777 = vsel %vm776, %v775, 0.0
    %778 = vadd.xlane.f32.xlu0 %v777
    %v779 = vpop.xlane.xlu0 %778
    %v780 = vrcp.pop 128.0
    %v781 = vmul.f32 %v779, %v780
    %v782 = vsub.f32 %v775, %v781
    %v783 = vmul.f32 %v782, %v782
    %v784 = vsel %vm776, %v783, 0.0
    %785 = vadd.xlane.f32.xlu0 %v784
    %v786 = vpop.xlane.xlu0 %785
    %v787 = vmul.f32 %v786, %v780
    %v788 = vadd.f32 %v787, 1e-05
    %v789 = vrsqrt.pop %v788
    %v790 = vmul.f32 %v782, %v789
    %v791 = vld [vmem:[%s2] sm:$0x1]
    %v793 = vlaneseq
    %v794 = vshrl.u32 %v793, 7
    %v795 = vsub.s32 0, %v794
    %v796 = vrot.slane %v791, %v795
    %v798 = vmul.f32 %v790, %v796
    %v799 = vld [vmem:[%s3] sm:$0x1]
    %v801 = vlaneseq
    %v802 = vshrl.u32 %v801, 7
    %v803 = vsub.s32 0, %v802
    %v804 = vrot.slane %v799, %v803
    %v806 = vadd.f32 %v798, %v804
    %vm807 = vcmp.ge.f32.partialorder %v806, 0.0
    %v808 = vmul.f32 %v806, 0.01
    %v809 = vsel %vm807, %v806, %v808
    %v810 = vld [vmem:[%s4] sm:$0xff]
    %v811 = vld [vmem:[%s4 + $0x8] sm:$0xff]
    %v812 = vld [vmem:[%s4 + $0x10] sm:$0xff]
    %v813 = vld [vmem:[%s4 + $0x18] sm:$0xff]
    %v814 = vld [vmem:[%s4 + $0x20] sm:$0xff]
    %v815 = vld [vmem:[%s4 + $0x28] sm:$0xff]
    %v816 = vld [vmem:[%s4 + $0x30] sm:$0xff]
    %v817 = vld [vmem:[%s4 + $0x38] sm:$0xff]
    %v818 = vld [vmem:[%s4 + $0x40] sm:$0xff]
    %v819 = vld [vmem:[%s4 + $0x48] sm:$0xff]
    %v820 = vld [vmem:[%s4 + $0x50] sm:$0xff]
    %v821 = vld [vmem:[%s4 + $0x58] sm:$0xff]
    %v822 = vld [vmem:[%s4 + $0x60] sm:$0xff]
    %v823 = vld [vmem:[%s4 + $0x68] sm:$0xff]
    %v824 = vld [vmem:[%s4 + $0x70] sm:$0xff]
    %v825 = vld [vmem:[%s4 + $0x78] sm:$0xff]
    %v826 = vld [vmem:[%s5] sm:$0x1]
    %v828 = vlaneseq
    %v829 = vshrl.u32 %v828, 7
    %v830 = vsub.s32 0, %v829
    %v831 = vrot.slane %v826, %v830
    %833 = vmatprep.subr.mxu0 0.0
    %834 = vmatpush1.msra.mxu0 %v810
    %835 = vmatprep.subr.mxu0 0.0
    %836 = vmatpush1.msra.mxu0 %v811
    %837 = vmatprep.subr.mxu0 0.0
    %838 = vmatpush1.msra.mxu0 %v812
    %839 = vmatprep.subr.mxu0 0.0
    %840 = vmatpush1.msra.mxu0 %v813
    %841 = vmatprep.subr.mxu0 0.0
    %842 = vmatpush1.msra.mxu0 %v814
    %843 = vmatprep.subr.mxu0 0.0
    %844 = vmatpush1.msra.mxu0 %v815
    %845 = vmatprep.subr.mxu0 0.0
    %846 = vmatpush1.msra.mxu0 %v816
    %847 = vmatprep.subr.mxu0 0.0
    %848 = vmatpush1.msra.mxu0 %v817
    %849 = vmatprep.subr.mxu0 0.0
    %850 = vmatpush1.msra.mxu0 %v818
    %851 = vmatprep.subr.mxu0 0.0
    %852 = vmatpush1.msra.mxu0 %v819
    %853 = vmatprep.subr.mxu0 0.0
    %854 = vmatpush1.msra.mxu0 %v820
    %855 = vmatprep.subr.mxu0 0.0
    %856 = vmatpush1.msra.mxu0 %v821
    %857 = vmatprep.subr.mxu0 0.0
    %858 = vmatpush1.msra.mxu0 %v822
    %859 = vmatprep.subr.mxu0 0.0
    %860 = vmatpush1.msra.mxu0 %v823
    %861 = vmatprep.subr.mxu0 0.0
    %862 = vmatpush1.msra.mxu0 %v824
    %863 = vmatprep.subr.mxu0 0.0
    %864 = vmatpush1.msra.mxu0 %v825
    %865 = vmatprep.subr.mxu0 0.0
    %866 = vmatpush1.msra.mxu0 0.0
    %867 = vmatprep.subr.mxu0 0.0
    %868 = vmatpush1.msra.mxu0 0.0
    %869 = vmatprep.subr.mxu0 0.0
    %870 = vmatpush1.msra.mxu0 0.0
    %871 = vmatprep.subr.mxu0 0.0
    %872 = vmatpush1.msra.mxu0 0.0
    %873 = vmatprep.subr.mxu0 0.0
    %874 = vmatpush1.msra.mxu0 0.0
    %875 = vmatprep.subr.mxu0 0.0
    %876 = vmatpush1.msra.mxu0 0.0
    %877 = vmatprep.subr.mxu0 0.0
    %878 = vmatpush1.msra.mxu0 0.0
    %879 = vmatprep.subr.mxu0 0.0
    %880 = vmatpush1.msra.mxu0 0.0
    %881 = vmatprep.subr.mxu0 0.0
    %882 = vmatpush1.msra.mxu0 0.0
    %883 = vmatprep.subr.mxu0 0.0
    %884 = vmatpush1.msra.mxu0 0.0
    %885 = vmatprep.subr.mxu0 0.0
    %886 = vmatpush1.msra.mxu0 0.0
    %887 = vmatprep.subr.mxu0 0.0
    %888 = vmatpush1.msra.mxu0 0.0
    %889 = vmatprep.subr.mxu0 0.0
    %890 = vmatpush1.msra.mxu0 0.0
    %891 = vmatprep.subr.mxu0 0.0
    %892 = vmatpush1.msra.mxu0 0.0
    %893 = vmatprep.subr.mxu0 0.0
    %894 = vmatpush1.msra.mxu0 0.0
    %895 = vmatprep.subr.mxu0 0.0
    %896 = vmatpush1.msra.mxu0 0.0
    %897 = vmatprep.mubr.f32.mxu0 0.0
    %898 = vmatmul.mubr.f32.gmra.mrb[0].mxu0 %v809
    %v899 = vpop.f32.mrb[0].mxu0
    %v900 = vadd.f32 %v831, %v899
    %v901 = vpop.f32.mrb[0].mxu0
    %902 = vdwg.mxu0
    %903 = vst [vmem:[#allocation2] sm:$0x3] %v900
    // Predicated region
    $region26: #{face_classifier_forward.3} parent=1 // pred_check
      _
    $region27: #{face_classifier_forward.3} parent=1 // pred_check_branch
      %905 = sbr.rel (0) target = $region29
    $region28: #{face_classifier_forward.3} parent=1 // pred_region
      %s907 = ssub.s32 32, 32
      %908 = vsyncadd [#allocation3], %s907
      %s910 = sshll.u32 [#allocation2], 4
      %s911 = int_to_ptr.vmem [resolvable:$true] %s910
      %913 = dma.vmem_to_hbm [thread:$0]  %s911, 32, %s6, [#allocation3]
    $region29: #{face_classifier_forward.3} parent=1 // pred_fallthru
      _
    // Predicated region
    $region30: #{face_classifier_forward.3} parent=1 // pred_check
      _
    $region31: #{face_classifier_forward.3} parent=1 // pred_check_branch
      %915 = sbr.rel (0) target = $region33
    $region32: #{face_classifier_forward.3} parent=1 // pred_region
      %916 = dma.done [#allocation3], 32
    $region33: #{face_classifier_forward.3} parent=1 // pred_fallthru
      _
    %917 = vsyncpa [#allocation3], 1

</llo_original>
